<compile_context>
chip_gen: v7x
topology: tpu7x:2x2x1
jax: 0.10.0
libtpu: 0.0.40
codegen_flags: <defaults>
</compile_context>

<pallas_src>
import functools

import jax
import jax.numpy as jnp
from jax.experimental import pallas as pl
from jax.experimental.pallas import tpu as pltpu

LN_EPS = 1e-5
COMPUTE_DTYPE = jnp.bfloat16   # MXU input dtype; accumulation stays f32
TILE_M_MAX = 256               # rows per grid step (multiple of 128 on v5e too)
TILE_K_MAX = 512               # K-chunk when d_in is large


def _round_up(x, m):
    return (x + m - 1) // m * m


def _layernorm(h, gamma, beta):
    mean = jnp.mean(h, axis=-1, keepdims=True)
    var = jnp.mean((h - mean) ** 2, axis=-1, keepdims=True)
    inv = jax.lax.rsqrt(var + LN_EPS)
    return (h - mean) * inv * gamma + beta


def _hidden_epilogue(h, gamma, beta):
    h = h * jax.nn.sigmoid(h)                    # SiLU
    return _layernorm(h, gamma, beta)


def _proj_epilogue(p, gamma, beta):
    return _layernorm(p, gamma, beta) + p        # dropout = identity (eval)


def _fused_matmul_kernel(x_ref, w_ref, b_ref, g_ref, be_ref, o_ref, acc_ref,
                         *, epilogue):
    """acc += x_tile @ w_tile (bf16 -> f32); epilogue + store on the last K step."""
    k = pl.program_id(1)

    @pl.when(k == 0)
    def _():
        acc_ref[...] = jnp.zeros_like(acc_ref)

    acc_ref[...] += jnp.dot(x_ref[...], w_ref[...],
                            preferred_element_type=jnp.float32)

    @pl.when(k == pl.num_programs(1) - 1)
    def _():
        h = acc_ref[...] + b_ref[...]            # (1, d_out) f32 broadcast
        o_ref[...] = epilogue(h, g_ref[...], be_ref[...]).astype(o_ref.dtype)


def _vmem_limit_bytes(tile_m, tile_k, d_out, grid_k, out_dtype):
    out_b = jnp.dtype(out_dtype).itemsize
    w_bufs = 1 if grid_k == 1 else 2             # weight single-buffered if invariant
    est = (2 * tile_m * tile_k * 2               # x tile, double-buffered, bf16
           + w_bufs * tile_k * d_out * 2         # weight tile, bf16
           + 2 * tile_m * d_out * out_b          # out tile, double-buffered
           + tile_m * d_out * 4                  # f32 accumulator scratch
           + 3 * 2 * d_out * 4)                  # bias / gamma / beta
    est = int(est * 1.3) + (2 << 20)
    # >= 32 MiB scoped default, <= smallest physical VMEM (v7x: 64 MiB) w/ headroom
    return min(max(est, 32 << 20), 60 << 20)


def _run_fused_layer(x, w, b, gamma, beta, *, epilogue, out_dtype, tile_m):
    """y[n, d_out] = epilogue(x[n, d_in] @ w[d_in, d_out] + b).  n % tile_m == 0."""
    n, d_in = x.shape
    assert w.shape[0] == d_in
    d_out = w.shape[1]
    assert n % tile_m == 0

    # K tiling: keep full d_in resident when small; otherwise split into
    # TILE_K_MAX chunks (zero-pad K if needed — zeros contribute nothing).
    if d_in <= TILE_K_MAX:
        tile_k, k_pad = d_in, d_in
    else:
        tile_k = TILE_K_MAX
        k_pad = _round_up(d_in, tile_k)
        if k_pad != d_in:
            x = jnp.pad(x, ((0, 0), (0, k_pad - d_in)))
            w = jnp.pad(w, ((0, k_pad - d_in), (0, 0)))

    grid_m = n // tile_m
    grid_k = k_pad // tile_k

    if grid_k == 1:
        # Weight block is grid-invariant -> single-buffer it (halves its VMEM).
        w_spec = pl.BlockSpec((tile_k, d_out), lambda i, k: (k, 0),
                              pipeline_mode=pl.Buffered(1))
    else:
        w_spec = pl.BlockSpec((tile_k, d_out), lambda i, k: (k, 0))

    kernel = functools.partial(_fused_matmul_kernel, epilogue=epilogue)
    return pl.pallas_call(
        kernel,
        out_shape=jax.ShapeDtypeStruct((n, d_out), out_dtype),
        grid_spec=pltpu.PrefetchScalarGridSpec(
            num_scalar_prefetch=0,
            grid=(grid_m, grid_k),
            in_specs=[
                pl.BlockSpec((tile_m, tile_k), lambda i, k: (i, k)),   # x tile
                w_spec,                                                # weight
                pl.BlockSpec((1, d_out), lambda i, k: (0, 0)),         # bias
                pl.BlockSpec((1, d_out), lambda i, k: (0, 0)),         # ln gamma
                pl.BlockSpec((1, d_out), lambda i, k: (0, 0)),         # ln beta
            ],
            out_specs=pl.BlockSpec((tile_m, d_out), lambda i, k: (i, 0)),
            scratch_shapes=[pltpu.VMEM((tile_m, d_out), jnp.float32)],
        ),
        compiler_params=pltpu.CompilerParams(
            dimension_semantics=("parallel", "arbitrary"),
            vmem_limit_bytes=_vmem_limit_bytes(tile_m, tile_k, d_out,
                                               grid_k, out_dtype),
        ),
    )(x, w, b, gamma, beta)


# ---------------------------------------------------------------------------
# Parameters
# ---------------------------------------------------------------------------

def xavier_uniform(key, shape):
    fan_out, fan_in = shape  # PyTorch Linear weight layout [out, in]
    limit = (6.0 / (fan_in + fan_out)) ** 0.5
    return jax.random.uniform(key, shape, jnp.float32, -limit, limit)


def init_params(key, embed_dim, hidden_dim, num_mlp_layers):
    """PyTorch-layout f32 params (weights [out, in], vectors 1-D)."""
    params = {"layers": []}
    for i in range(num_mlp_layers):
        d_in = embed_dim if i == 0 else hidden_dim
        key, k_w, k_b, k_g, k_be = jax.random.split(key, 5)
        params["layers"].append({
            "w": xavier_uniform(k_w, (hidden_dim, d_in)),
            "b": jax.random.uniform(k_b, (hidden_dim,), jnp.float32, -0.1, 0.1),
            "gamma": jax.random.uniform(k_g, (hidden_dim,), jnp.float32, 0.9, 1.1),
            "beta": jax.random.uniform(k_be, (hidden_dim,), jnp.float32, -0.1, 0.1),
        })
    key, k_w, k_b, k_g, k_be = jax.random.split(key, 5)
    params["proj_w"] = xavier_uniform(k_w, (embed_dim, hidden_dim))
    params["proj_b"] = jax.random.uniform(k_b, (embed_dim,), jnp.float32, -0.1, 0.1)
    params["norm_gamma"] = jax.random.uniform(k_g, (embed_dim,), jnp.float32, 0.9, 1.1)
    params["norm_beta"] = jax.random.uniform(k_be, (embed_dim,), jnp.float32, -0.1, 0.1)
    return params


def prepare_params(params):
    """One-time (outside jit): transpose weights to [in, out], cast to bf16,
    reshape vectors to (1, d).  Removes per-forward .T copies from HBM."""
    def prep(w, b, g, be):
        return {"w": jnp.asarray(w).T.astype(COMPUTE_DTYPE),
                "b": jnp.asarray(b, jnp.float32)[None, :],
                "gamma": jnp.asarray(g, jnp.float32)[None, :],
                "beta": jnp.asarray(be, jnp.float32)[None, :]}
    prepared = {"layers": [prep(l["w"], l["b"], l["gamma"], l["beta"])
                           for l in params["layers"]]}
    head = prep(params["proj_w"], params["proj_b"],
                params["norm_gamma"], params["norm_beta"])
    prepared["proj_w"] = head["w"]
    prepared["proj_b"] = head["b"]
    prepared["norm_gamma"] = head["gamma"]
    prepared["norm_beta"] = head["beta"]
    return prepared


# ---------------------------------------------------------------------------
# Forward
# ---------------------------------------------------------------------------

@jax.jit
def mlp_forward(x, prepared):
    """x: [batch, seq, embed_dim] f32 -> [batch, seq, embed_dim] f32."""
    bsz, seq, e = x.shape
    n = bsz * seq
    h = x.reshape(n, e).astype(COMPUTE_DTYPE)

    # Row (M) tiling: pad rows once to a multiple of tile_m, slice at the end.
    tile_m = min(TILE_M_MAX, _round_up(max(n, 1), 8))
    n_pad = _round_up(n, tile_m)
    if n_pad != n:
        h = jnp.pad(h, ((0, n_pad - n), (0, 0)))

    for lyr in prepared["layers"]:
        h = _run_fused_layer(h, lyr["w"], lyr["b"], lyr["gamma"], lyr["beta"],
                             epilogue=_hidden_epilogue,
                             out_dtype=COMPUTE_DTYPE, tile_m=tile_m)

    out = _run_fused_layer(h, prepared["proj_w"], prepared["proj_b"],
                           prepared["norm_gamma"], prepared["norm_beta"],
                           epilogue=_proj_epilogue,
                           out_dtype=jnp.float32, tile_m=tile_m)
    out = out[:n]
    return out.reshape(bsz, seq, e)


def mlp_forward_ref(x, params):
    """Pure-JAX reference mirroring the kernel's precision (bf16 matmul inputs,
    f32 accumulation/epilogue, bf16 inter-layer activations; eval dropout)."""
    def ln(h, g, b):
        m = jnp.mean(h, axis=-1, keepdims=True)
        v = jnp.mean((h - m) ** 2, axis=-1, keepdims=True)
        return (h - m) * jax.lax.rsqrt(v + LN_EPS) * g + b

    bsz, seq, e = x.shape
    h = x.reshape(bsz * seq, e).astype(COMPUTE_DTYPE)
    for lyr in params["layers"]:
        z = jnp.dot(h, lyr["w"].T.astype(COMPUTE_DTYPE),
                    preferred_element_type=jnp.float32) + lyr["b"]
        z = z * jax.nn.sigmoid(z)
        h = ln(z, lyr["gamma"], lyr["beta"]).astype(COMPUTE_DTYPE)
    p = jnp.dot(h, params["proj_w"].T.astype(COMPUTE_DTYPE),
                preferred_element_type=jnp.float32) + params["proj_b"]
    out = ln(p, params["norm_gamma"], params["norm_beta"]) + p
    return out.reshape(bsz, seq, e).astype(jnp.float32)


if __name__ == "__main__":
    batch, seq = 2, 8
    embed_dim, hidden_dim, num_mlp_layers = 128, 256, 2   # lane-dense (x128) dims

    key = jax.random.PRNGKey(0)
    k_x, k_p = jax.random.split(key)
    x = jax.random.normal(k_x, (batch, seq, embed_dim), jnp.float32)
    params = init_params(k_p, embed_dim, hidden_dim, num_mlp_layers)
    prepared = prepare_params(params)

    out = jax.block_until_ready(mlp_forward(x, prepared))
    ref = jax.block_until_ready(mlp_forward_ref(x, params))

    assert out.shape == (batch, seq, embed_dim)
    assert out.dtype == jnp.float32
    max_err = float(jnp.max(jnp.abs(out - ref)))
    assert jnp.allclose(out, ref, atol=1e-2, rtol=1e-2), \
        f"mismatch vs reference (max abs err {max_err})"

    print("KERNEL_OK")
</pallas_src>

<mosaic_0001>
module attributes {stable_mosaic.version = 11 : i64} {
  func.func @_fused_matmul_kernel(%arg0: i32, %arg1: i32, %arg2: memref<16x128xbf16, #tpu.memory_space<vmem>>, %arg3: memref<128x256xbf16, #tpu.memory_space<vmem>>, %arg4: memref<1x256xf32, #tpu.memory_space<vmem>>, %arg5: memref<1x256xf32, #tpu.memory_space<vmem>>, %arg6: memref<1x256xf32, #tpu.memory_space<vmem>>, %arg7: memref<16x256xbf16, #tpu.memory_space<vmem>>, %arg8: memref<16x256xf32, #tpu.memory_space<vmem>>) attributes {dimension_semantics = [#tpu.dimension_semantics<parallel>, #tpu.dimension_semantics<arbitrary>], iteration_bounds = array<i64: 1, 1>, scalar_prefetch = 0 : i64, scratch_operands = 1 : i64, tpu.core_type = #tpu.core_type<tc>, window_params = [{transform_indices = @transform_0, window_bounds = array<i64: 16, 128>}, {pipeline_mode = #tpu.pipeline_mode<synchronous>, transform_indices = @transform_1, window_bounds = array<i64: 128, 256>}, {pipeline_mode = #tpu.pipeline_mode<synchronous>, transform_indices = @transform_2, window_bounds = array<i64: 1, 256>}, {pipeline_mode = #tpu.pipeline_mode<synchronous>, transform_indices = @transform_3, window_bounds = array<i64: 1, 256>}, {pipeline_mode = #tpu.pipeline_mode<synchronous>, transform_indices = @transform_4, window_bounds = array<i64: 1, 256>}, {transform_indices = @transform_5, window_bounds = array<i64: 16, 256>}]} {
    %c0_i32 = arith.constant 0 : i32
    %0 = arith.cmpi eq, %arg1, %c0_i32 : i32
    %1 = arith.extui %0 : i1 to i32
    %c0_i32_0 = arith.constant 0 : i32
    %2 = arith.cmpi ne, %1, %c0_i32_0 : i32
    scf.if %2 {
      %cst_10 = arith.constant 0.000000e+00 : f32
      %12 = vector.broadcast %cst_10 : f32 to vector<16x256xf32>
      %c0_11 = arith.constant 0 : index
      %c0_12 = arith.constant 0 : index
      %13 = vector.load %arg8[%c0_11, %c0_12] : memref<16x256xf32, #tpu.memory_space<vmem>>, vector<16x256xf32>
      tpu.vector_store %arg8[%c0_11, %c0_12], %12 {strides = array<i32>} : memref<16x256xf32, #tpu.memory_space<vmem>>, vector<16x256xf32>,
    } else {
    }
    %c0 = arith.constant 0 : index
    %c0_1 = arith.constant 0 : index
    %3 = vector.load %arg8[%c0, %c0_1] : memref<16x256xf32, #tpu.memory_space<vmem>>, vector<16x256xf32>
    %c0_2 = arith.constant 0 : index
    %c0_3 = arith.constant 0 : index
    %4 = vector.load %arg2[%c0_2, %c0_3] : memref<16x128xbf16, #tpu.memory_space<vmem>>, vector<16x128xbf16>
    %c0_4 = arith.constant 0 : index
    %c0_5 = arith.constant 0 : index
    %5 = vector.load %arg3[%c0_4, %c0_5] : memref<128x256xbf16, #tpu.memory_space<vmem>>, vector<128x256xbf16>
    %cst = arith.constant dense<0.000000e+00> : vector<16x256xf32>
    %6 = tpu.matmul %4, %5, %cst {dimension_numbers = #tpu.dot_dimension_numbers<[1], [0], [0], [1], [0, 0, 1, 1], [], []>} : vector<16x128xbf16>, vector<128x256xbf16>, vector<16x256xf32> -> vector<16x256xf32>
    %7 = arith.addf %3, %6 : vector<16x256xf32>
    %c0_6 = arith.constant 0 : index
    %c0_7 = arith.constant 0 : index
    %8 = vector.load %arg8[%c0_6, %c0_7] : memref<16x256xf32, #tpu.memory_space<vmem>>, vector<16x256xf32>
    tpu.vector_store %arg8[%c0_6, %c0_7], %7 {strides = array<i32>} : memref<16x256xf32, #tpu.memory_space<vmem>>, vector<16x256xf32>,
    %c0_i32_8 = arith.constant 0 : i32
    %9 = arith.cmpi eq, %arg1, %c0_i32_8 : i32
    %10 = arith.extui %9 : i1 to i32
    %c0_i32_9 = arith.constant 0 : i32
    %11 = arith.cmpi ne, %10, %c0_i32_9 : i32
    scf.if %11 {
      %c0_10 = arith.constant 0 : index
      %c0_11 = arith.constant 0 : index
      %12 = vector.load %arg8[%c0_10, %c0_11] : memref<16x256xf32, #tpu.memory_space<vmem>>, vector<16x256xf32>
      %c0_12 = arith.constant 0 : index
      %c0_13 = arith.constant 0 : index
      %13 = vector.load %arg4[%c0_12, %c0_13] : memref<1x256xf32, #tpu.memory_space<vmem>>, vector<1x256xf32>
      %14 = vector.broadcast %13 : vector<1x256xf32> to vector<16x256xf32>
      %15 = arith.addf %12, %14 : vector<16x256xf32>
      %c0_14 = arith.constant 0 : index
      %c0_15 = arith.constant 0 : index
      %16 = vector.load %arg5[%c0_14, %c0_15] : memref<1x256xf32, #tpu.memory_space<vmem>>, vector<1x256xf32>
      %c0_16 = arith.constant 0 : index
      %c0_17 = arith.constant 0 : index
      %17 = vector.load %arg6[%c0_16, %c0_17] : memref<1x256xf32, #tpu.memory_space<vmem>>, vector<1x256xf32>
      %18 = arith.negf %15 : vector<16x256xf32>
      %19 = math.exp %18 : vector<16x256xf32>
      %cst_18 = arith.constant 1.000000e+00 : f32
      %20 = vector.broadcast %cst_18 : f32 to vector<16x256xf32>
      %21 = arith.addf %20, %19 : vector<16x256xf32>
      %22 = arith.divf %20, %21 : vector<16x256xf32>
      %23 = arith.mulf %15, %22 : vector<16x256xf32>
      %cst_19 = arith.constant dense<0.000000e+00> : vector<16xf32>
      %24 = vector.multi_reduction <add>, %23, %cst_19 [1] : vector<16x256xf32> to vector<16xf32>
      %25 = vector.shape_cast %24 : vector<16xf32> to vector<16x1xf32>
      %cst_20 = arith.constant 2.560000e+02 : f32
      %26 = vector.broadcast %cst_20 : f32 to vector<16x1xf32>
      %27 = arith.divf %25, %26 : vector<16x1xf32>
      %28 = vector.broadcast %27 : vector<16x1xf32> to vector<16x256xf32>
      %29 = arith.subf %23, %28 : vector<16x256xf32>
      %30 = arith.mulf %29, %29 : vector<16x256xf32>
      %cst_21 = arith.constant dense<0.000000e+00> : vector<16xf32>
      %31 = vector.multi_reduction <add>, %30, %cst_21 [1] : vector<16x256xf32> to vector<16xf32>
      %32 = vector.shape_cast %31 : vector<16xf32> to vector<16x1xf32>
      %cst_22 = arith.constant 2.560000e+02 : f32
      %33 = vector.broadcast %cst_22 : f32 to vector<16x1xf32>
      %34 = arith.divf %32, %33 : vector<16x1xf32>
      %cst_23 = arith.constant 9.99999974E-6 : f32
      %35 = vector.broadcast %cst_23 : f32 to vector<16x1xf32>
      %36 = arith.addf %34, %35 : vector<16x1xf32>
      %37 = math.rsqrt %36 : vector<16x1xf32>
      %38 = vector.broadcast %27 : vector<16x1xf32> to vector<16x256xf32>
      %39 = arith.subf %23, %38 : vector<16x256xf32>
      %40 = vector.broadcast %37 : vector<16x1xf32> to vector<16x256xf32>
      %41 = arith.mulf %39, %40 : vector<16x256xf32>
      %42 = vector.broadcast %16 : vector<1x256xf32> to vector<16x256xf32>
      %43 = arith.mulf %41, %42 : vector<16x256xf32>
      %44 = vector.broadcast %17 : vector<1x256xf32> to vector<16x256xf32>
      %45 = arith.addf %43, %44 : vector<16x256xf32>
      %46 = arith.truncf %45 : vector<16x256xf32> to vector<16x256xbf16>
      %c0_24 = arith.constant 0 : index
      %c0_25 = arith.constant 0 : index
      %47 = vector.load %arg7[%c0_24, %c0_25] : memref<16x256xbf16, #tpu.memory_space<vmem>>, vector<16x256xbf16>
      tpu.vector_store %arg7[%c0_24, %c0_25], %46 {strides = array<i32>} : memref<16x256xbf16, #tpu.memory_space<vmem>>, vector<16x256xbf16>,
    } else {
    }
    return
  }
  func.func @transform_0(%arg0: i32, %arg1: i32) -> (i32, i32) {
    %c0_i32 = arith.constant 0 : i32
    return %arg0, %arg1 : i32, i32
  }
  func.func @transform_1(%arg0: i32, %arg1: i32) -> (i32, i32) {
    %c0_i32 = arith.constant 0 : i32
    %c0_i32_0 = arith.constant 0 : i32
    return %arg1, %c0_i32 : i32, i32
  }
  func.func @transform_2(%arg0: i32, %arg1: i32) -> (i32, i32) {
    %c0_i32 = arith.constant 0 : i32
    %c0_i32_0 = arith.constant 0 : i32
    %c0_i32_1 = arith.constant 0 : i32
    return %c0_i32, %c0_i32_0 : i32, i32
  }
  func.func @transform_3(%arg0: i32, %arg1: i32) -> (i32, i32) {
    %c0_i32 = arith.constant 0 : i32
    %c0_i32_0 = arith.constant 0 : i32
    %c0_i32_1 = arith.constant 0 : i32
    return %c0_i32, %c0_i32_0 : i32, i32
  }
  func.func @transform_4(%arg0: i32, %arg1: i32) -> (i32, i32) {
    %c0_i32 = arith.constant 0 : i32
    %c0_i32_0 = arith.constant 0 : i32
    %c0_i32_1 = arith.constant 0 : i32
    return %c0_i32, %c0_i32_0 : i32, i32
  }
  func.func @transform_5(%arg0: i32, %arg1: i32) -> (i32, i32) {
    %c0_i32 = arith.constant 0 : i32
    %c0_i32_0 = arith.constant 0 : i32
    return %arg0, %c0_i32 : i32, i32
  }
}

module attributes {stable_mosaic.version = 11 : i64} {
  func.func @_fused_matmul_kernel(%arg0: i32, %arg1: i32, %arg2: memref<16x256xbf16, #tpu.memory_space<vmem>>, %arg3: memref<256x128xbf16, #tpu.memory_space<vmem>>, %arg4: memref<1x128xf32, #tpu.memory_space<vmem>>, %arg5: memref<1x128xf32, #tpu.memory_space<vmem>>, %arg6: memref<1x128xf32, #tpu.memory_space<vmem>>, %arg7: memref<16x128xf32, #tpu.memory_space<vmem>>, %arg8: memref<16x128xf32, #tpu.memory_space<vmem>>) attributes {dimension_semantics = [#tpu.dimension_semantics<parallel>, #tpu.dimension_semantics<arbitrary>], iteration_bounds = array<i64: 1, 1>, scalar_prefetch = 0 : i64, scratch_operands = 1 : i64, tpu.core_type = #tpu.core_type<tc>, window_params = [{transform_indices = @transform_0, window_bounds = array<i64: 16, 256>}, {pipeline_mode = #tpu.pipeline_mode<synchronous>, transform_indices = @transform_1, window_bounds = array<i64: 256, 128>}, {pipeline_mode = #tpu.pipeline_mode<synchronous>, transform_indices = @transform_2, window_bounds = array<i64: 1, 128>}, {pipeline_mode = #tpu.pipeline_mode<synchronous>, transform_indices = @transform_3, window_bounds = array<i64: 1, 128>}, {pipeline_mode = #tpu.pipeline_mode<synchronous>, transform_indices = @transform_4, window_bounds = array<i64: 1, 128>}, {transform_indices = @transform_5, window_bounds = array<i64: 16, 128>}]} {
    %c0_i32 = arith.constant 0 : i32
    %0 = arith.cmpi eq, %arg1, %c0_i32 : i32
    %1 = arith.extui %0 : i1 to i32
    %c0_i32_0 = arith.constant 0 : i32
    %2 = arith.cmpi ne, %1, %c0_i32_0 : i32
    scf.if %2 {
      %cst_10 = arith.constant 0.000000e+00 : f32
      %12 = vector.broadcast %cst_10 : f32 to vector<16x128xf32>
      %c0_11 = arith.constant 0 : index
      %c0_12 = arith.constant 0 : index
      %13 = vector.load %arg8[%c0_11, %c0_12] : memref<16x128xf32, #tpu.memory_space<vmem>>, vector<16x128xf32>
      tpu.vector_store %arg8[%c0_11, %c0_12], %12 {strides = array<i32>} : memref<16x128xf32, #tpu.memory_space<vmem>>, vector<16x128xf32>,
    } else {
    }
    %c0 = arith.constant 0 : index
    %c0_1 = arith.constant 0 : index
    %3 = vector.load %arg8[%c0, %c0_1] : memref<16x128xf32, #tpu.memory_space<vmem>>, vector<16x128xf32>
    %c0_2 = arith.constant 0 : index
    %c0_3 = arith.constant 0 : index
    %4 = vector.load %arg2[%c0_2, %c0_3] : memref<16x256xbf16, #tpu.memory_space<vmem>>, vector<16x256xbf16>
    %c0_4 = arith.constant 0 : index
    %c0_5 = arith.constant 0 : index
    %5 = vector.load %arg3[%c0_4, %c0_5] : memref<256x128xbf16, #tpu.memory_space<vmem>>, vector<256x128xbf16>
    %cst = arith.constant dense<0.000000e+00> : vector<16x128xf32>
    %6 = tpu.matmul %4, %5, %cst {dimension_numbers = #tpu.dot_dimension_numbers<[1], [0], [0], [1], [0, 0, 1, 1], [], []>} : vector<16x256xbf16>, vector<256x128xbf16>, vector<16x128xf32> -> vector<16x128xf32>
    %7 = arith.addf %3, %6 : vector<16x128xf32>
    %c0_6 = arith.constant 0 : index
    %c0_7 = arith.constant 0 : index
    %8 = vector.load %arg8[%c0_6, %c0_7] : memref<16x128xf32, #tpu.memory_space<vmem>>, vector<16x128xf32>
    tpu.vector_store %arg8[%c0_6, %c0_7], %7 {strides = array<i32>} : memref<16x128xf32, #tpu.memory_space<vmem>>, vector<16x128xf32>,
    %c0_i32_8 = arith.constant 0 : i32
    %9 = arith.cmpi eq, %arg1, %c0_i32_8 : i32
    %10 = arith.extui %9 : i1 to i32
    %c0_i32_9 = arith.constant 0 : i32
    %11 = arith.cmpi ne, %10, %c0_i32_9 : i32
    scf.if %11 {
      %c0_10 = arith.constant 0 : index
      %c0_11 = arith.constant 0 : index
      %12 = vector.load %arg8[%c0_10, %c0_11] : memref<16x128xf32, #tpu.memory_space<vmem>>, vector<16x128xf32>
      %c0_12 = arith.constant 0 : index
      %c0_13 = arith.constant 0 : index
      %13 = vector.load %arg4[%c0_12, %c0_13] : memref<1x128xf32, #tpu.memory_space<vmem>>, vector<1x128xf32>
      %14 = vector.broadcast %13 : vector<1x128xf32> to vector<16x128xf32>
      %15 = arith.addf %12, %14 : vector<16x128xf32>
      %c0_14 = arith.constant 0 : index
      %c0_15 = arith.constant 0 : index
      %16 = vector.load %arg5[%c0_14, %c0_15] : memref<1x128xf32, #tpu.memory_space<vmem>>, vector<1x128xf32>
      %c0_16 = arith.constant 0 : index
      %c0_17 = arith.constant 0 : index
      %17 = vector.load %arg6[%c0_16, %c0_17] : memref<1x128xf32, #tpu.memory_space<vmem>>, vector<1x128xf32>
      %cst_18 = arith.constant dense<0.000000e+00> : vector<16xf32>
      %18 = vector.multi_reduction <add>, %15, %cst_18 [1] : vector<16x128xf32> to vector<16xf32>
      %19 = vector.shape_cast %18 : vector<16xf32> to vector<16x1xf32>
      %cst_19 = arith.constant 1.280000e+02 : f32
      %20 = vector.broadcast %cst_19 : f32 to vector<16x1xf32>
      %21 = arith.divf %19, %20 : vector<16x1xf32>
      %22 = vector.broadcast %21 : vector<16x1xf32> to vector<16x128xf32>
      %23 = arith.subf %15, %22 : vector<16x128xf32>
      %24 = arith.mulf %23, %23 : vector<16x128xf32>
      %cst_20 = arith.constant dense<0.000000e+00> : vector<16xf32>
      %25 = vector.multi_reduction <add>, %24, %cst_20 [1] : vector<16x128xf32> to vector<16xf32>
      %26 = vector.shape_cast %25 : vector<16xf32> to vector<16x1xf32>
      %cst_21 = arith.constant 1.280000e+02 : f32
      %27 = vector.broadcast %cst_21 : f32 to vector<16x1xf32>
      %28 = arith.divf %26, %27 : vector<16x1xf32>
      %cst_22 = arith.constant 9.99999974E-6 : f32
      %29 = vector.broadcast %cst_22 : f32 to vector<16x1xf32>
      %30 = arith.addf %28, %29 : vector<16x1xf32>
      %31 = math.rsqrt %30 : vector<16x1xf32>
      %32 = vector.broadcast %21 : vector<16x1xf32> to vector<16x128xf32>
      %33 = arith.subf %15, %32 : vector<16x128xf32>
      %34 = vector.broadcast %31 : vector<16x1xf32> to vector<16x128xf32>
      %35 = arith.mulf %33, %34 : vector<16x128xf32>
      %36 = vector.broadcast %16 : vector<1x128xf32> to vector<16x128xf32>
      %37 = arith.mulf %35, %36 : vector<16x128xf32>
      %38 = vector.broadcast %17 : vector<1x128xf32> to vector<16x128xf32>
      %39 = arith.addf %37, %38 : vector<16x128xf32>
      %40 = arith.addf %39, %15 : vector<16x128xf32>
      %c0_23 = arith.constant 0 : index
      %c0_24 = arith.constant 0 : index
      %41 = vector.load %arg7[%c0_23, %c0_24] : memref<16x128xf32, #tpu.memory_space<vmem>>, vector<16x128xf32>
      tpu.vector_store %arg7[%c0_23, %c0_24], %40 {strides = array<i32>} : memref<16x128xf32, #tpu.memory_space<vmem>>, vector<16x128xf32>,
    } else {
    }
    return
  }
  func.func @transform_0(%arg0: i32, %arg1: i32) -> (i32, i32) {
    %c0_i32 = arith.constant 0 : i32
    return %arg0, %arg1 : i32, i32
  }
  func.func @transform_1(%arg0: i32, %arg1: i32) -> (i32, i32) {
    %c0_i32 = arith.constant 0 : i32
    %c0_i32_0 = arith.constant 0 : i32
    return %arg1, %c0_i32 : i32, i32
  }
  func.func @transform_2(%arg0: i32, %arg1: i32) -> (i32, i32) {
    %c0_i32 = arith.constant 0 : i32
    %c0_i32_0 = arith.constant 0 : i32
    %c0_i32_1 = arith.constant 0 : i32
    return %c0_i32, %c0_i32_0 : i32, i32
  }
  func.func @transform_3(%arg0: i32, %arg1: i32) -> (i32, i32) {
    %c0_i32 = arith.constant 0 : i32
    %c0_i32_0 = arith.constant 0 : i32
    %c0_i32_1 = arith.constant 0 : i32
    return %c0_i32, %c0_i32_0 : i32, i32
  }
  func.func @transform_4(%arg0: i32, %arg1: i32) -> (i32, i32) {
    %c0_i32 = arith.constant 0 : i32
    %c0_i32_0 = arith.constant 0 : i32
    %c0_i32_1 = arith.constant 0 : i32
    return %c0_i32, %c0_i32_0 : i32, i32
  }
  func.func @transform_5(%arg0: i32, %arg1: i32) -> (i32, i32) {
    %c0_i32 = arith.constant 0 : i32
    %c0_i32_0 = arith.constant 0 : i32
    return %arg0, %c0_i32 : i32, i32
  }
}

module attributes {stable_mosaic.version = 11 : i64} {
  func.func @_fused_matmul_kernel(%arg0: i32, %arg1: i32, %arg2: memref<16x256xbf16, #tpu.memory_space<vmem>>, %arg3: memref<256x256xbf16, #tpu.memory_space<vmem>>, %arg4: memref<1x256xf32, #tpu.memory_space<vmem>>, %arg5: memref<1x256xf32, #tpu.memory_space<vmem>>, %arg6: memref<1x256xf32, #tpu.memory_space<vmem>>, %arg7: memref<16x256xbf16, #tpu.memory_space<vmem>>, %arg8: memref<16x256xf32, #tpu.memory_space<vmem>>) attributes {dimension_semantics = [#tpu.dimension_semantics<parallel>, #tpu.dimension_semantics<arbitrary>], iteration_bounds = array<i64: 1, 1>, scalar_prefetch = 0 : i64, scratch_operands = 1 : i64, tpu.core_type = #tpu.core_type<tc>, window_params = [{transform_indices = @transform_0, window_bounds = array<i64: 16, 256>}, {pipeline_mode = #tpu.pipeline_mode<synchronous>, transform_indices = @transform_1, window_bounds = array<i64: 256, 256>}, {pipeline_mode = #tpu.pipeline_mode<synchronous>, transform_indices = @transform_2, window_bounds = array<i64: 1, 256>}, {pipeline_mode = #tpu.pipeline_mode<synchronous>, transform_indices = @transform_3, window_bounds = array<i64: 1, 256>}, {pipeline_mode = #tpu.pipeline_mode<synchronous>, transform_indices = @transform_4, window_bounds = array<i64: 1, 256>}, {transform_indices = @transform_5, window_bounds = array<i64: 16, 256>}]} {
    %c0_i32 = arith.constant 0 : i32
    %0 = arith.cmpi eq, %arg1, %c0_i32 : i32
    %1 = arith.extui %0 : i1 to i32
    %c0_i32_0 = arith.constant 0 : i32
    %2 = arith.cmpi ne, %1, %c0_i32_0 : i32
    scf.if %2 {
      %cst_10 = arith.constant 0.000000e+00 : f32
      %12 = vector.broadcast %cst_10 : f32 to vector<16x256xf32>
      %c0_11 = arith.constant 0 : index
      %c0_12 = arith.constant 0 : index
      %13 = vector.load %arg8[%c0_11, %c0_12] : memref<16x256xf32, #tpu.memory_space<vmem>>, vector<16x256xf32>
      tpu.vector_store %arg8[%c0_11, %c0_12], %12 {strides = array<i32>} : memref<16x256xf32, #tpu.memory_space<vmem>>, vector<16x256xf32>,
    } else {
    }
    %c0 = arith.constant 0 : index
    %c0_1 = arith.constant 0 : index
    %3 = vector.load %arg8[%c0, %c0_1] : memref<16x256xf32, #tpu.memory_space<vmem>>, vector<16x256xf32>
    %c0_2 = arith.constant 0 : index
    %c0_3 = arith.constant 0 : index
    %4 = vector.load %arg2[%c0_2, %c0_3] : memref<16x256xbf16, #tpu.memory_space<vmem>>, vector<16x256xbf16>
    %c0_4 = arith.constant 0 : index
    %c0_5 = arith.constant 0 : index
    %5 = vector.load %arg3[%c0_4, %c0_5] : memref<256x256xbf16, #tpu.memory_space<vmem>>, vector<256x256xbf16>
    %cst = arith.constant dense<0.000000e+00> : vector<16x256xf32>
    %6 = tpu.matmul %4, %5, %cst {dimension_numbers = #tpu.dot_dimension_numbers<[1], [0], [0], [1], [0, 0, 1, 1], [], []>} : vector<16x256xbf16>, vector<256x256xbf16>, vector<16x256xf32> -> vector<16x256xf32>
    %7 = arith.addf %3, %6 : vector<16x256xf32>
    %c0_6 = arith.constant 0 : index
    %c0_7 = arith.constant 0 : index
    %8 = vector.load %arg8[%c0_6, %c0_7] : memref<16x256xf32, #tpu.memory_space<vmem>>, vector<16x256xf32>
    tpu.vector_store %arg8[%c0_6, %c0_7], %7 {strides = array<i32>} : memref<16x256xf32, #tpu.memory_space<vmem>>, vector<16x256xf32>,
    %c0_i32_8 = arith.constant 0 : i32
    %9 = arith.cmpi eq, %arg1, %c0_i32_8 : i32
    %10 = arith.extui %9 : i1 to i32
    %c0_i32_9 = arith.constant 0 : i32
    %11 = arith.cmpi ne, %10, %c0_i32_9 : i32
    scf.if %11 {
      %c0_10 = arith.constant 0 : index
      %c0_11 = arith.constant 0 : index
      %12 = vector.load %arg8[%c0_10, %c0_11] : memref<16x256xf32, #tpu.memory_space<vmem>>, vector<16x256xf32>
      %c0_12 = arith.constant 0 : index
      %c0_13 = arith.constant 0 : index
      %13 = vector.load %arg4[%c0_12, %c0_13] : memref<1x256xf32, #tpu.memory_space<vmem>>, vector<1x256xf32>
      %14 = vector.broadcast %13 : vector<1x256xf32> to vector<16x256xf32>
      %15 = arith.addf %12, %14 : vector<16x256xf32>
      %c0_14 = arith.constant 0 : index
      %c0_15 = arith.constant 0 : index
      %16 = vector.load %arg5[%c0_14, %c0_15] : memref<1x256xf32, #tpu.memory_space<vmem>>, vector<1x256xf32>
      %c0_16 = arith.constant 0 : index
      %c0_17 = arith.constant 0 : index
      %17 = vector.load %arg6[%c0_16, %c0_17] : memref<1x256xf32, #tpu.memory_space<vmem>>, vector<1x256xf32>
      %18 = arith.negf %15 : vector<16x256xf32>
      %19 = math.exp %18 : vector<16x256xf32>
      %cst_18 = arith.constant 1.000000e+00 : f32
      %20 = vector.broadcast %cst_18 : f32 to vector<16x256xf32>
      %21 = arith.addf %20, %19 : vector<16x256xf32>
      %22 = arith.divf %20, %21 : vector<16x256xf32>
      %23 = arith.mulf %15, %22 : vector<16x256xf32>
      %cst_19 = arith.constant dense<0.000000e+00> : vector<16xf32>
      %24 = vector.multi_reduction <add>, %23, %cst_19 [1] : vector<16x256xf32> to vector<16xf32>
      %25 = vector.shape_cast %24 : vector<16xf32> to vector<16x1xf32>
      %cst_20 = arith.constant 2.560000e+02 : f32
      %26 = vector.broadcast %cst_20 : f32 to vector<16x1xf32>
      %27 = arith.divf %25, %26 : vector<16x1xf32>
      %28 = vector.broadcast %27 : vector<16x1xf32> to vector<16x256xf32>
      %29 = arith.subf %23, %28 : vector<16x256xf32>
      %30 = arith.mulf %29, %29 : vector<16x256xf32>
      %cst_21 = arith.constant dense<0.000000e+00> : vector<16xf32>
      %31 = vector.multi_reduction <add>, %30, %cst_21 [1] : vector<16x256xf32> to vector<16xf32>
      %32 = vector.shape_cast %31 : vector<16xf32> to vector<16x1xf32>
      %cst_22 = arith.constant 2.560000e+02 : f32
      %33 = vector.broadcast %cst_22 : f32 to vector<16x1xf32>
      %34 = arith.divf %32, %33 : vector<16x1xf32>
      %cst_23 = arith.constant 9.99999974E-6 : f32
      %35 = vector.broadcast %cst_23 : f32 to vector<16x1xf32>
      %36 = arith.addf %34, %35 : vector<16x1xf32>
      %37 = math.rsqrt %36 : vector<16x1xf32>
      %38 = vector.broadcast %27 : vector<16x1xf32> to vector<16x256xf32>
      %39 = arith.subf %23, %38 : vector<16x256xf32>
      %40 = vector.broadcast %37 : vector<16x1xf32> to vector<16x256xf32>
      %41 = arith.mulf %39, %40 : vector<16x256xf32>
      %42 = vector.broadcast %16 : vector<1x256xf32> to vector<16x256xf32>
      %43 = arith.mulf %41, %42 : vector<16x256xf32>
      %44 = vector.broadcast %17 : vector<1x256xf32> to vector<16x256xf32>
      %45 = arith.addf %43, %44 : vector<16x256xf32>
      %46 = arith.truncf %45 : vector<16x256xf32> to vector<16x256xbf16>
      %c0_24 = arith.constant 0 : index
      %c0_25 = arith.constant 0 : index
      %47 = vector.load %arg7[%c0_24, %c0_25] : memref<16x256xbf16, #tpu.memory_space<vmem>>, vector<16x256xbf16>
      tpu.vector_store %arg7[%c0_24, %c0_25], %46 {strides = array<i32>} : memref<16x256xbf16, #tpu.memory_space<vmem>>, vector<16x256xbf16>,
    } else {
    }
    return
  }
  func.func @transform_0(%arg0: i32, %arg1: i32) -> (i32, i32) {
    %c0_i32 = arith.constant 0 : i32
    return %arg0, %arg1 : i32, i32
  }
  func.func @transform_1(%arg0: i32, %arg1: i32) -> (i32, i32) {
    %c0_i32 = arith.constant 0 : i32
    %c0_i32_0 = arith.constant 0 : i32
    return %arg1, %c0_i32 : i32, i32
  }
  func.func @transform_2(%arg0: i32, %arg1: i32) -> (i32, i32) {
    %c0_i32 = arith.constant 0 : i32
    %c0_i32_0 = arith.constant 0 : i32
    %c0_i32_1 = arith.constant 0 : i32
    return %c0_i32, %c0_i32_0 : i32, i32
  }
  func.func @transform_3(%arg0: i32, %arg1: i32) -> (i32, i32) {
    %c0_i32 = arith.constant 0 : i32
    %c0_i32_0 = arith.constant 0 : i32
    %c0_i32_1 = arith.constant 0 : i32
    return %c0_i32, %c0_i32_0 : i32, i32
  }
  func.func @transform_4(%arg0: i32, %arg1: i32) -> (i32, i32) {
    %c0_i32 = arith.constant 0 : i32
    %c0_i32_0 = arith.constant 0 : i32
    %c0_i32_1 = arith.constant 0 : i32
    return %c0_i32, %c0_i32_0 : i32, i32
  }
  func.func @transform_5(%arg0: i32, %arg1: i32) -> (i32, i32) {
    %c0_i32 = arith.constant 0 : i32
    %c0_i32_0 = arith.constant 0 : i32
    return %arg0, %c0_i32 : i32, i32
  }
}

</mosaic_0001>

<llo_original>
// kernel: mlp_forward.4
$region0: #{mlp_forward.4}
  #allocation0 [shape = 'u32[]', space=smem, size = 0x4, offset = 0x4, fixed_abs, tag = 'smem constant byte address 0x4 - core index']
  #allocation1 [shape = 'u32[144,128]{1,0:T(1,128)}', space=vmem, size = 0x12000, scoped, tag = 'internal scratch']
  #allocation2 [shape = 'f32[16,256]{1,0:T(8,128)}', space=vmem, size = 0x4000, scoped, tag = 'scratch operand']
  %s0 = inlined_call_operand.vmem [shape: bf16[16,256], index: 0, kind: input, shape index: {}]
  %s1 = inlined_call_operand.hbm [shape: bf16[256,256], index: 1, kind: input, shape index: {}]
  %s2 = inlined_call_operand.vmem [shape: f32[1,256], index: 2, kind: input, shape index: {}]
  %s3 = inlined_call_operand.vmem [shape: f32[1,256], index: 3, kind: input, shape index: {}]
  %s4 = inlined_call_operand.vmem [shape: f32[1,256], index: 4, kind: input, shape index: {}]
  %s5 = inlined_call_operand.vmem [shape: bf16[16,256], index: 5, kind: output, shape index: {}]
  %s6 = sld [smem:[#allocation0]]
  $region42: #{mlp_forward.4} parent=0
    _
  %s8 = ssub.s32 1, %s6
  %s9 = scalar_select 0, %s8, %s6
  $region1: #{mlp_forward.4} parent=0
    #allocation3 [shape = 'u8[131072]{0}', space=vmem, size = 0x20000, scoped, tag = 'input window, operand 1, single buffered']
    #allocation4 [shape = 's32[1]{0}', space=sflag, size = 0x4, scoped, tag = 'scoped memory for mlp_forward.4']
    %10 = vsyncpa [#allocation4], 0
    // Predicated region
    $region2: #{mlp_forward.4} parent=1 // pred_check
      _
    $region3: #{mlp_forward.4} parent=1 // pred_check_branch
      %12 = sbr.rel (0) target = $region5
    $region4: #{mlp_forward.4} parent=1 // pred_region
      _
    $region5: #{mlp_forward.4} parent=1 // pred_fallthru
      _
    // Predicated region
    $region6: #{mlp_forward.4} parent=1 // pred_check
      _
    $region7: #{mlp_forward.4} parent=1 // pred_check_branch
      %14 = sbr.rel (0) target = $region9
    $region8: #{mlp_forward.4} parent=1 // pred_region
      %s16 = ssub.s32 4096, 4096
      %17 = vsyncadd [#allocation4], %s16
      %s18 = sshll.u32 [#allocation3], 4
      %s19 = int_to_ptr.vmem [resolvable:$true] %s18
      %24 = dma.hbm_to_vmem [thread:$0]  %s1, 4096, %s19, [#allocation4], 128, 128, 8
    $region9: #{mlp_forward.4} parent=1 // pred_fallthru
      _
    // Predicated region
    $region10: #{mlp_forward.4} parent=1 // pred_check
      _
    $region11: #{mlp_forward.4} parent=1 // pred_check_branch
      %26 = sbr.rel (0) target = $region13
    $region12: #{mlp_forward.4} parent=1 // pred_region
      _
    $region13: #{mlp_forward.4} parent=1 // pred_fallthru
      _
    // Predicated region
    $region14: #{mlp_forward.4} parent=1 // pred_check
      _
    $region15: #{mlp_forward.4} parent=1 // pred_check_branch
      %28 = sbr.rel (0) target = $region17
    $region16: #{mlp_forward.4} parent=1 // pred_region
      _
    $region17: #{mlp_forward.4} parent=1 // pred_fallthru
      _
    // Predicated region
    $region18: #{mlp_forward.4} parent=1 // pred_check
      _
    $region19: #{mlp_forward.4} parent=1 // pred_check_branch
      %30 = sbr.rel (0) target = $region21
    $region20: #{mlp_forward.4} parent=1 // pred_region
      _
    $region21: #{mlp_forward.4} parent=1 // pred_fallthru
      _
    // Predicated region
    $region22: #{mlp_forward.4} parent=1 // pred_check
      _
    $region23: #{mlp_forward.4} parent=1 // pred_check_branch
      %32 = sbr.rel (0) target = $region25
    $region24: #{mlp_forward.4} parent=1 // pred_region
      %33 = dma.done [#allocation4], 4096
    $region25: #{mlp_forward.4} parent=1 // pred_fallthru
      _
    %p34 = scmp.eq.s32.totalorder 0, 0
    // Predicated region
    $region26: #{mlp_forward.4} parent=1 // pred_check
      %p35 = pneg %p34
    $region27: #{mlp_forward.4} parent=1 // pred_check_branch
      %37 = sbr.rel (%p35) target = $region29
    $region28: #{mlp_forward.4} parent=1 // pred_region
      %38 = vst [vmem:[#allocation2] sm:$0xff] 0.0
      %39 = vst [vmem:[#allocation2 + $0x8] sm:$0xff] 0.0
      %40 = vst [vmem:[#allocation2 + $0x10] sm:$0xff] 0.0
      %41 = vst [vmem:[#allocation2 + $0x18] sm:$0xff] 0.0
    $region29: #{mlp_forward.4} parent=1 // pred_fallthru
      _
    %v42 = vld [vmem:[#allocation2] sm:$0xff]
    %v43 = vld [vmem:[#allocation2 + $0x8] sm:$0xff]
    %v44 = vld [vmem:[#allocation2 + $0x10] sm:$0xff]
    %v45 = vld [vmem:[#allocation2 + $0x18] sm:$0xff]
    %v46 = vld [vmem:[%s0] sm:$0xff]
    %v47 = vld [vmem:[%s0 + $0x8] sm:$0xff]
    %v48 = vld [vmem:[#allocation3] sm:$0xff]
    %v49 = vld [vmem:[#allocation3 + $0x8] sm:$0xff]
    %v50 = vld [vmem:[#allocation3 + $0x10] sm:$0xff]
    %v51 = vld [vmem:[#allocation3 + $0x18] sm:$0xff]
    %v52 = vld [vmem:[#allocation3 + $0x20] sm:$0xff]
    %v53 = vld [vmem:[#allocation3 + $0x28] sm:$0xff]
    %v54 = vld [vmem:[#allocation3 + $0x30] sm:$0xff]
    %v55 = vld [vmem:[#allocation3 + $0x38] sm:$0xff]
    %v56 = vld [vmem:[#allocation3 + $0x40] sm:$0xff]
    %v57 = vld [vmem:[#allocation3 + $0x48] sm:$0xff]
    %v58 = vld [vmem:[#allocation3 + $0x50] sm:$0xff]
    %v59 = vld [vmem:[#allocation3 + $0x58] sm:$0xff]
    %v60 = vld [vmem:[#allocation3 + $0x60] sm:$0xff]
    %v61 = vld [vmem:[#allocation3 + $0x68] sm:$0xff]
    %v62 = vld [vmem:[#allocation3 + $0x70] sm:$0xff]
    %v63 = vld [vmem:[#allocation3 + $0x78] sm:$0xff]
    %v64 = vld [vmem:[#allocation3 + $0x80] sm:$0xff]
    %v65 = vld [vmem:[#allocation3 + $0x88] sm:$0xff]
    %v66 = vld [vmem:[#allocation3 + $0x90] sm:$0xff]
    %v67 = vld [vmem:[#allocation3 + $0x98] sm:$0xff]
    %v68 = vld [vmem:[#allocation3 + $0xa0] sm:$0xff]
    %v69 = vld [vmem:[#allocation3 + $0xa8] sm:$0xff]
    %v70 = vld [vmem:[#allocation3 + $0xb0] sm:$0xff]
    %v71 = vld [vmem:[#allocation3 + $0xb8] sm:$0xff]
    %v72 = vld [vmem:[#allocation3 + $0xc0] sm:$0xff]
    %v73 = vld [vmem:[#allocation3 + $0xc8] sm:$0xff]
    %v74 = vld [vmem:[#allocation3 + $0xd0] sm:$0xff]
    %v75 = vld [vmem:[#allocation3 + $0xd8] sm:$0xff]
    %v76 = vld [vmem:[#allocation3 + $0xe0] sm:$0xff]
    %v77 = vld [vmem:[#allocation3 + $0xe8] sm:$0xff]
    %v78 = vld [vmem:[#allocation3 + $0xf0] sm:$0xff]
    %v79 = vld [vmem:[#allocation3 + $0xf8] sm:$0xff]
    %v82 = vunpack.c.l.b16 %v46
    %v83 = vunpack.c.h.b16 %v46
    %v84 = vunpack.c.l.b16 %v47
    %v85 = vunpack.c.h.b16 %v47
    %v86 = vpack.c.b16 %v84, %v82
    %v87 = vpack.c.b16 %v85, %v83
    %v122 = vunpack.c.l.b16 %v48
    %v123 = vunpack.c.h.b16 %v48
    %v124 = vunpack.c.l.b16 %v49
    %v125 = vunpack.c.h.b16 %v49
    %v126 = vunpack.c.l.b16 %v50
    %v127 = vunpack.c.h.b16 %v50
    %v128 = vunpack.c.l.b16 %v51
    %v129 = vunpack.c.h.b16 %v51
    %v130 = vunpack.c.l.b16 %v52
    %v131 = vunpack.c.h.b16 %v52
    %v132 = vunpack.c.l.b16 %v53
    %v133 = vunpack.c.h.b16 %v53
    %v134 = vunpack.c.l.b16 %v54
    %v135 = vunpack.c.h.b16 %v54
    %v136 = vunpack.c.l.b16 %v55
    %v137 = vunpack.c.h.b16 %v55
    %v138 = vunpack.c.l.b16 %v56
    %v139 = vunpack.c.h.b16 %v56
    %v140 = vunpack.c.l.b16 %v57
    %v141 = vunpack.c.h.b16 %v57
    %v142 = vunpack.c.l.b16 %v58
    %v143 = vunpack.c.h.b16 %v58
    %v144 = vunpack.c.l.b16 %v59
    %v145 = vunpack.c.h.b16 %v59
    %v146 = vunpack.c.l.b16 %v60
    %v147 = vunpack.c.h.b16 %v60
    %v148 = vunpack.c.l.b16 %v61
    %v149 = vunpack.c.h.b16 %v61
    %v150 = vunpack.c.l.b16 %v62
    %v151 = vunpack.c.h.b16 %v62
    %v152 = vunpack.c.l.b16 %v63
    %v153 = vunpack.c.h.b16 %v63
    %v154 = vunpack.c.l.b16 %v64
    %v155 = vunpack.c.h.b16 %v64
    %v156 = vunpack.c.l.b16 %v65
    %v157 = vunpack.c.h.b16 %v65
    %v158 = vunpack.c.l.b16 %v66
    %v159 = vunpack.c.h.b16 %v66
    %v160 = vunpack.c.l.b16 %v67
    %v161 = vunpack.c.h.b16 %v67
    %v162 = vunpack.c.l.b16 %v68
    %v163 = vunpack.c.h.b16 %v68
    %v164 = vunpack.c.l.b16 %v69
    %v165 = vunpack.c.h.b16 %v69
    %v166 = vunpack.c.l.b16 %v70
    %v167 = vunpack.c.h.b16 %v70
    %v168 = vunpack.c.l.b16 %v71
    %v169 = vunpack.c.h.b16 %v71
    %v170 = vunpack.c.l.b16 %v72
    %v171 = vunpack.c.h.b16 %v72
    %v172 = vunpack.c.l.b16 %v73
    %v173 = vunpack.c.h.b16 %v73
    %v174 = vunpack.c.l.b16 %v74
    %v175 = vunpack.c.h.b16 %v74
    %v176 = vunpack.c.l.b16 %v75
    %v177 = vunpack.c.h.b16 %v75
    %v178 = vunpack.c.l.b16 %v76
    %v179 = vunpack.c.h.b16 %v76
    %v180 = vunpack.c.l.b16 %v77
    %v181 = vunpack.c.h.b16 %v77
    %v182 = vunpack.c.l.b16 %v78
    %v183 = vunpack.c.h.b16 %v78
    %v184 = vunpack.c.l.b16 %v79
    %v185 = vunpack.c.h.b16 %v79
    %v186 = vpack.c.b16 %v124, %v122
    %v187 = vpack.c.b16 %v125, %v123
    %v188 = vpack.c.b16 %v128, %v126
    %v189 = vpack.c.b16 %v129, %v127
    %v190 = vpack.c.b16 %v132, %v130
    %v191 = vpack.c.b16 %v133, %v131
    %v192 = vpack.c.b16 %v136, %v134
    %v193 = vpack.c.b16 %v137, %v135
    %v194 = vpack.c.b16 %v140, %v138
    %v195 = vpack.c.b16 %v141, %v139
    %v196 = vpack.c.b16 %v144, %v142
    %v197 = vpack.c.b16 %v145, %v143
    %v198 = vpack.c.b16 %v148, %v146
    %v199 = vpack.c.b16 %v149, %v147
    %v200 = vpack.c.b16 %v152, %v150
    %v201 = vpack.c.b16 %v153, %v151
    %v202 = vpack.c.b16 %v156, %v154
    %v203 = vpack.c.b16 %v157, %v155
    %v204 = vpack.c.b16 %v160, %v158
    %v205 = vpack.c.b16 %v161, %v159
    %v206 = vpack.c.b16 %v164, %v162
    %v207 = vpack.c.b16 %v165, %v163
    %v208 = vpack.c.b16 %v168, %v166
    %v209 = vpack.c.b16 %v169, %v167
    %v210 = vpack.c.b16 %v172, %v170
    %v211 = vpack.c.b16 %v173, %v171
    %v212 = vpack.c.b16 %v176, %v174
    %v213 = vpack.c.b16 %v177, %v175
    %v214 = vpack.c.b16 %v180, %v178
    %v215 = vpack.c.b16 %v181, %v179
    %v216 = vpack.c.b16 %v184, %v182
    %v217 = vpack.c.b16 %v185, %v183
    %250 = vmatprep.subr.bf16.mxu0 %v187
    %251 = vmatpush1.bf16.msra.mxu0 %v186
    %252 = vmatprep.subr.bf16.mxu0 %v189
    %253 = vmatpush1.bf16.msra.mxu0 %v188
    %254 = vmatprep.subr.bf16.mxu0 %v191
    %255 = vmatpush1.bf16.msra.mxu0 %v190
    %256 = vmatprep.subr.bf16.mxu0 %v193
    %257 = vmatpush1.bf16.msra.mxu0 %v192
    %258 = vmatprep.subr.bf16.mxu0 %v195
    %259 = vmatpush1.bf16.msra.mxu0 %v194
    %260 = vmatprep.subr.bf16.mxu0 %v197
    %261 = vmatpush1.bf16.msra.mxu0 %v196
    %262 = vmatprep.subr.bf16.mxu0 %v199
    %263 = vmatpush1.bf16.msra.mxu0 %v198
    %264 = vmatprep.subr.bf16.mxu0 %v201
    %265 = vmatpush1.bf16.msra.mxu0 %v200
    %266 = vmatprep.subr.bf16.mxu0 %v203
    %267 = vmatpush1.bf16.msra.mxu0 %v202
    %268 = vmatprep.subr.bf16.mxu0 %v205
    %269 = vmatpush1.bf16.msra.mxu0 %v204
    %270 = vmatprep.subr.bf16.mxu0 %v207
    %271 = vmatpush1.bf16.msra.mxu0 %v206
    %272 = vmatprep.subr.bf16.mxu0 %v209
    %273 = vmatpush1.bf16.msra.mxu0 %v208
    %274 = vmatprep.subr.bf16.mxu0 %v211
    %275 = vmatpush1.bf16.msra.mxu0 %v210
    %276 = vmatprep.subr.bf16.mxu0 %v213
    %277 = vmatpush1.bf16.msra.mxu0 %v212
    %278 = vmatprep.subr.bf16.mxu0 %v215
    %279 = vmatpush1.bf16.msra.mxu0 %v214
    %280 = vmatprep.subr.bf16.mxu0 %v217
    %281 = vmatpush1.bf16.msra.mxu0 %v216
    %282 = vmatprep.mubr.bf16.mxu0 %v87
    %283 = vmatmul.mubr.bf16.gmra.mrb[0].mxu0 %v86
    %v284 = vpop.f32.mrb[0].mxu0
    %v285 = vadd.f32 0.0, %v284
    %v286 = vpop.f32.mrb[0].mxu0
    %v287 = vadd.f32 0.0, %v286
    %v288 = vpop.f32.mrb[0].mxu0
    %v289 = vadd.f32 0.0, %v288
    %v290 = vpop.f32.mrb[0].mxu0
    %v291 = vadd.f32 0.0, %v290
    %292 = vdwg.mxu0
    %v293 = vadd.f32 %v42, %v285
    %v294 = vadd.f32 %v43, %v287
    %v295 = vadd.f32 %v44, %v289
    %v296 = vadd.f32 %v45, %v291
    %297 = vst [vmem:[#allocation2] sm:$0xff] %v293
    %298 = vst [vmem:[#allocation2 + $0x8] sm:$0xff] %v294
    %299 = vst [vmem:[#allocation2 + $0x10] sm:$0xff] %v295
    %300 = vst [vmem:[#allocation2 + $0x18] sm:$0xff] %v296
    // Predicated region
    $region30: #{mlp_forward.4} parent=1 // pred_check
      %p301 = pneg %p34
    $region31: #{mlp_forward.4} parent=1 // pred_check_branch
      %303 = sbr.rel (%p301) target = $region33
    $region32: #{mlp_forward.4} parent=1 // pred_region
      %v304 = vld [vmem:[#allocation2] sm:$0xff]
      %v305 = vld [vmem:[#allocation2 + $0x8] sm:$0xff]
      %v306 = vld [vmem:[#allocation2 + $0x10] sm:$0xff]
      %v307 = vld [vmem:[#allocation2 + $0x18] sm:$0xff]
      %v308 = vld [vmem:[%s2] sm:$0x3]
      %v310 = vlaneseq
      %v311 = vshrl.u32 %v310, 7
      %v312 = vsub.s32 0, %v311
      %v313 = vrot.slane %v308, %v312
      %v314 = vlaneseq
      %v315 = vshrl.u32 %v314, 7
      %v316 = vsub.s32 1, %v315
      %v317 = vrot.slane %v308, %v316
      %v320 = vadd.f32 %v304, %v313
      %v321 = vadd.f32 %v305, %v317
      %v322 = vadd.f32 %v306, %v313
      %v323 = vadd.f32 %v307, %v317
      %v324 = vld [vmem:[%s3] sm:$0x3]
      %v325 = vld [vmem:[%s4] sm:$0x3]
      %v326 = vxor.u32 %v320, 2147483648
      %v327 = vxor.u32 %v321, 2147483648
      %v328 = vxor.u32 %v322, 2147483648
      %v329 = vxor.u32 %v323, 2147483648
      %v330 = vmul.f32 %v326, 1.442695
      %v331 = vpow.pop %v330
      %v332 = vmul.f32 %v327, 1.442695
      %v333 = vpow.pop %v332
      %v334 = vmul.f32 %v328, 1.442695
      %v335 = vpow.pop %v334
      %v336 = vmul.f32 %v329, 1.442695
      %v337 = vpow.pop %v336
      %v338 = vadd.f32 %v331, 1.0
      %v339 = vadd.f32 %v333, 1.0
      %v340 = vadd.f32 %v335, 1.0
      %v341 = vadd.f32 %v337, 1.0
      %v342 = vrcp.pop %v338
      %v343 = vmul.f32 1.0, %v342
      %v344 = vrcp.pop %v339
      %v345 = vmul.f32 1.0, %v344
      %v346 = vrcp.pop %v340
      %v347 = vmul.f32 1.0, %v346
      %v348 = vrcp.pop %v341
      %v349 = vmul.f32 1.0, %v348
      %v350 = vmul.f32 %v320, %v343
      %v351 = vmul.f32 %v321, %v345
      %v352 = vmul.f32 %v322, %v347
      %v353 = vmul.f32 %v323, %v349
      %v354 = vadd.f32 %v350, %v351
      %355 = vadd.xlane.f32.xlu0 %v354
      %v356 = vpop.xlane.xlu0 %355
      %v357 = vadd.f32 %v352, %v353
      %358 = vadd.xlane.f32.xlu0 %v357
      %v359 = vpop.xlane.xlu0 %358
      %v360 = vrcp.pop 256.0
      %v361 = vmul.f32 %v356, %v360
      %v362 = vmul.f32 %v359, %v360
      %v363 = vsub.f32 %v350, %v361
      %v364 = vsub.f32 %v351, %v361
      %v365 = vsub.f32 %v352, %v362
      %v366 = vsub.f32 %v353, %v362
      %v367 = vmul.f32 %v363, %v363
      %v368 = vmul.f32 %v364, %v364
      %v369 = vmul.f32 %v365, %v365
      %v370 = vmul.f32 %v366, %v366
      %v371 = vadd.f32 %v367, %v368
      %372 = vadd.xlane.f32.xlu0 %v371
      %v373 = vpop.xlane.xlu0 %372
      %v374 = vadd.f32 %v369, %v370
      %375 = vadd.xlane.f32.xlu0 %v374
      %v376 = vpop.xlane.xlu0 %375
      %v377 = vmul.f32 %v373, %v360
      %v378 = vmul.f32 %v376, %v360
      %v379 = vadd.f32 %v377, 1e-05
      %v380 = vadd.f32 %v378, 1e-05
      %v381 = vrsqrt.pop %v379
      %v382 = vrsqrt.pop %v380
      %v383 = vmul.f32 %v363, %v381
      %v384 = vmul.f32 %v364, %v381
      %v385 = vmul.f32 %v365, %v382
      %v386 = vmul.f32 %v366, %v382
      %v388 = vlaneseq
      %v389 = vshrl.u32 %v388, 7
      %v390 = vsub.s32 0, %v389
      %v391 = vrot.slane %v324, %v390
      %v392 = vlaneseq
      %v393 = vshrl.u32 %v392, 7
      %v394 = vsub.s32 1, %v393
      %v395 = vrot.slane %v324, %v394
      %v398 = vmul.f32 %v383, %v391
      %v399 = vmul.f32 %v384, %v395
      %v400 = vmul.f32 %v385, %v391
      %v401 = vmul.f32 %v386, %v395
      %v403 = vlaneseq
      %v404 = vshrl.u32 %v403, 7
      %v405 = vsub.s32 0, %v404
      %v406 = vrot.slane %v325, %v405
      %v407 = vlaneseq
      %v408 = vshrl.u32 %v407, 7
      %v409 = vsub.s32 1, %v408
      %v410 = vrot.slane %v325, %v409
      %v413 = vadd.f32 %v398, %v406
      %v414 = vadd.f32 %v399, %v410
      %v415 = vadd.f32 %v400, %v406
      %v416 = vadd.f32 %v401, %v410
      %v417 = vpack.c.bf16 %v415, %v413
      %v418 = vpack.c.bf16 %v416, %v414
      %v421 = vunpack.c.l.b16 %v417
      %v422 = vunpack.c.l.b16 %v418
      %v423 = vunpack.c.h.b16 %v417
      %v424 = vunpack.c.h.b16 %v418
      %v425 = vpack.c.b16 %v422, %v421
      %v426 = vpack.c.b16 %v424, %v423
      %429 = vst [vmem:[%s5] sm:$0xff] %v425
      %430 = vst [vmem:[%s5 + $0x8] sm:$0xff] %v426
    $region33: #{mlp_forward.4} parent=1 // pred_fallthru
      _
    // Predicated region
    $region34: #{mlp_forward.4} parent=1 // pred_check
      _
    $region35: #{mlp_forward.4} parent=1 // pred_check_branch
      %432 = sbr.rel (0) target = $region37
    $region36: #{mlp_forward.4} parent=1 // pred_region
      _
    $region37: #{mlp_forward.4} parent=1 // pred_fallthru
      _
    // Predicated region
    $region38: #{mlp_forward.4} parent=1 // pred_check
      _
    $region39: #{mlp_forward.4} parent=1 // pred_check_branch
      %434 = sbr.rel (0) target = $region41
    $region40: #{mlp_forward.4} parent=1 // pred_region
      _
    $region41: #{mlp_forward.4} parent=1 // pred_fallthru
      _
    %435 = vsyncpa [#allocation4], 1

// kernel: mlp_forward.3
$region0: #{mlp_forward.3}
  #allocation0 [shape = 'u32[]', space=smem, size = 0x4, offset = 0x4, fixed_abs, tag = 'smem constant byte address 0x4 - core index']
  #allocation1 [shape = 'u32[144,128]{1,0:T(1,128)}', space=vmem, size = 0x12000, scoped, tag = 'internal scratch']
  #allocation2 [shape = 'f32[16,256]{1,0:T(8,128)}', space=vmem, size = 0x4000, scoped, tag = 'scratch operand']
  %s0 = inlined_call_operand.vmem [shape: bf16[16,128], index: 0, kind: input, shape index: {}]
  %s1 = inlined_call_operand.hbm [shape: bf16[128,256], index: 1, kind: input, shape index: {}]
  %s2 = inlined_call_operand.vmem [shape: f32[1,256], index: 2, kind: input, shape index: {}]
  %s3 = inlined_call_operand.vmem [shape: f32[1,256], index: 3, kind: input, shape index: {}]
  %s4 = inlined_call_operand.vmem [shape: f32[1,256], index: 4, kind: input, shape index: {}]
  %s5 = inlined_call_operand.vmem [shape: bf16[16,256], index: 5, kind: output, shape index: {}]
  %s6 = sld [smem:[#allocation0]]
  $region42: #{mlp_forward.3} parent=0
    _
  %s8 = ssub.s32 1, %s6
  %s9 = scalar_select 0, %s8, %s6
  $region1: #{mlp_forward.3} parent=0
    #allocation3 [shape = 'u8[65536]{0}', space=vmem, size = 0x10000, scoped, tag = 'input window, operand 1, single buffered']
    #allocation4 [shape = 's32[1]{0}', space=sflag, size = 0x4, scoped, tag = 'scoped memory for mlp_forward.3']
    %10 = vsyncpa [#allocation4], 0
    // Predicated region
    $region2: #{mlp_forward.3} parent=1 // pred_check
      _
    $region3: #{mlp_forward.3} parent=1 // pred_check_branch
      %12 = sbr.rel (0) target = $region5
    $region4: #{mlp_forward.3} parent=1 // pred_region
      _
    $region5: #{mlp_forward.3} parent=1 // pred_fallthru
      _
    // Predicated region
    $region6: #{mlp_forward.3} parent=1 // pred_check
      _
    $region7: #{mlp_forward.3} parent=1 // pred_check_branch
      %14 = sbr.rel (0) target = $region9
    $region8: #{mlp_forward.3} parent=1 // pred_region
      %s16 = ssub.s32 2048, 2048
      %17 = vsyncadd [#allocation4], %s16
      %s18 = sshll.u32 [#allocation3], 4
      %s19 = int_to_ptr.vmem [resolvable:$true] %s18
      %24 = dma.hbm_to_vmem [thread:$0]  %s1, 2048, %s19, [#allocation4], 128, 128, 8
    $region9: #{mlp_forward.3} parent=1 // pred_fallthru
      _
    // Predicated region
    $region10: #{mlp_forward.3} parent=1 // pred_check
      _
    $region11: #{mlp_forward.3} parent=1 // pred_check_branch
      %26 = sbr.rel (0) target = $region13
    $region12: #{mlp_forward.3} parent=1 // pred_region
      _
    $region13: #{mlp_forward.3} parent=1 // pred_fallthru
      _
    // Predicated region
    $region14: #{mlp_forward.3} parent=1 // pred_check
      _
    $region15: #{mlp_forward.3} parent=1 // pred_check_branch
      %28 = sbr.rel (0) target = $region17
    $region16: #{mlp_forward.3} parent=1 // pred_region
      _
    $region17: #{mlp_forward.3} parent=1 // pred_fallthru
      _
    // Predicated region
    $region18: #{mlp_forward.3} parent=1 // pred_check
      _
    $region19: #{mlp_forward.3} parent=1 // pred_check_branch
      %30 = sbr.rel (0) target = $region21
    $region20: #{mlp_forward.3} parent=1 // pred_region
      _
    $region21: #{mlp_forward.3} parent=1 // pred_fallthru
      _
    // Predicated region
    $region22: #{mlp_forward.3} parent=1 // pred_check
      _
    $region23: #{mlp_forward.3} parent=1 // pred_check_branch
      %32 = sbr.rel (0) target = $region25
    $region24: #{mlp_forward.3} parent=1 // pred_region
      %33 = dma.done [#allocation4], 2048
    $region25: #{mlp_forward.3} parent=1 // pred_fallthru
      _
    %p35 = scmp.eq.s32.totalorder 0, 0
    // Predicated region
    $region26: #{mlp_forward.3} parent=1 // pred_check
      %p36 = pneg %p35
    $region27: #{mlp_forward.3} parent=1 // pred_check_branch
      %38 = sbr.rel (%p36) target = $region29
    $region28: #{mlp_forward.3} parent=1 // pred_region
      %39 = vst [vmem:[#allocation2] sm:$0xff] 0.0
      %40 = vst [vmem:[#allocation2 + $0x8] sm:$0xff] 0.0
      %41 = vst [vmem:[#allocation2 + $0x10] sm:$0xff] 0.0
      %42 = vst [vmem:[#allocation2 + $0x18] sm:$0xff] 0.0
    $region29: #{mlp_forward.3} parent=1 // pred_fallthru
      _
    %v43 = vld [vmem:[#allocation2] sm:$0xff]
    %v44 = vld [vmem:[#allocation2 + $0x8] sm:$0xff]
    %v45 = vld [vmem:[#allocation2 + $0x10] sm:$0xff]
    %v46 = vld [vmem:[#allocation2 + $0x18] sm:$0xff]
    %v47 = vld [vmem:[%s0] sm:$0xf]
    %v48 = vld [vmem:[%s0 + $0x4] sm:$0xf]
    %v49 = vld [vmem:[#allocation3] sm:$0xff]
    %v50 = vld [vmem:[#allocation3 + $0x8] sm:$0xff]
    %v51 = vld [vmem:[#allocation3 + $0x10] sm:$0xff]
    %v52 = vld [vmem:[#allocation3 + $0x18] sm:$0xff]
    %v53 = vld [vmem:[#allocation3 + $0x20] sm:$0xff]
    %v54 = vld [vmem:[#allocation3 + $0x28] sm:$0xff]
    %v55 = vld [vmem:[#allocation3 + $0x30] sm:$0xff]
    %v56 = vld [vmem:[#allocation3 + $0x38] sm:$0xff]
    %v57 = vld [vmem:[#allocation3 + $0x40] sm:$0xff]
    %v58 = vld [vmem:[#allocation3 + $0x48] sm:$0xff]
    %v59 = vld [vmem:[#allocation3 + $0x50] sm:$0xff]
    %v60 = vld [vmem:[#allocation3 + $0x58] sm:$0xff]
    %v61 = vld [vmem:[#allocation3 + $0x60] sm:$0xff]
    %v62 = vld [vmem:[#allocation3 + $0x68] sm:$0xff]
    %v63 = vld [vmem:[#allocation3 + $0x70] sm:$0xff]
    %v64 = vld [vmem:[#allocation3 + $0x78] sm:$0xff]
    %v67 = vunpack.c.l.b16 %v47
    %v68 = vunpack.c.l.b16 %v48
    %v69 = vpack.c.b16 %v68, %v67
    %v87 = vunpack.c.l.b16 %v49
    %v88 = vunpack.c.h.b16 %v49
    %v89 = vunpack.c.l.b16 %v50
    %v90 = vunpack.c.h.b16 %v50
    %v91 = vunpack.c.l.b16 %v51
    %v92 = vunpack.c.h.b16 %v51
    %v93 = vunpack.c.l.b16 %v52
    %v94 = vunpack.c.h.b16 %v52
    %v95 = vunpack.c.l.b16 %v53
    %v96 = vunpack.c.h.b16 %v53
    %v97 = vunpack.c.l.b16 %v54
    %v98 = vunpack.c.h.b16 %v54
    %v99 = vunpack.c.l.b16 %v55
    %v100 = vunpack.c.h.b16 %v55
    %v101 = vunpack.c.l.b16 %v56
    %v102 = vunpack.c.h.b16 %v56
    %v103 = vunpack.c.l.b16 %v57
    %v104 = vunpack.c.h.b16 %v57
    %v105 = vunpack.c.l.b16 %v58
    %v106 = vunpack.c.h.b16 %v58
    %v107 = vunpack.c.l.b16 %v59
    %v108 = vunpack.c.h.b16 %v59
    %v109 = vunpack.c.l.b16 %v60
    %v110 = vunpack.c.h.b16 %v60
    %v111 = vunpack.c.l.b16 %v61
    %v112 = vunpack.c.h.b16 %v61
    %v113 = vunpack.c.l.b16 %v62
    %v114 = vunpack.c.h.b16 %v62
    %v115 = vunpack.c.l.b16 %v63
    %v116 = vunpack.c.h.b16 %v63
    %v117 = vunpack.c.l.b16 %v64
    %v118 = vunpack.c.h.b16 %v64
    %v119 = vpack.c.b16 %v89, %v87
    %v120 = vpack.c.b16 %v90, %v88
    %v121 = vpack.c.b16 %v93, %v91
    %v122 = vpack.c.b16 %v94, %v92
    %v123 = vpack.c.b16 %v97, %v95
    %v124 = vpack.c.b16 %v98, %v96
    %v125 = vpack.c.b16 %v101, %v99
    %v126 = vpack.c.b16 %v102, %v100
    %v127 = vpack.c.b16 %v105, %v103
    %v128 = vpack.c.b16 %v106, %v104
    %v129 = vpack.c.b16 %v109, %v107
    %v130 = vpack.c.b16 %v110, %v108
    %v131 = vpack.c.b16 %v113, %v111
    %v132 = vpack.c.b16 %v114, %v112
    %v133 = vpack.c.b16 %v117, %v115
    %v134 = vpack.c.b16 %v118, %v116
    %151 = vmatprep.subr.bf16.mxu0 %v120
    %152 = vmatpush1.bf16.msra.mxu0 %v119
    %153 = vmatprep.subr.bf16.mxu0 %v122
    %154 = vmatpush1.bf16.msra.mxu0 %v121
    %155 = vmatprep.subr.bf16.mxu0 %v124
    %156 = vmatpush1.bf16.msra.mxu0 %v123
    %157 = vmatprep.subr.bf16.mxu0 %v126
    %158 = vmatpush1.bf16.msra.mxu0 %v125
    %159 = vmatprep.subr.bf16.mxu0 %v128
    %160 = vmatpush1.bf16.msra.mxu0 %v127
    %161 = vmatprep.subr.bf16.mxu0 %v130
    %162 = vmatpush1.bf16.msra.mxu0 %v129
    %163 = vmatprep.subr.bf16.mxu0 %v132
    %164 = vmatpush1.bf16.msra.mxu0 %v131
    %165 = vmatprep.subr.bf16.mxu0 %v134
    %166 = vmatpush1.bf16.msra.mxu0 %v133
    %167 = vmatprep.subr.bf16.mxu0 0
    %168 = vmatpush1.bf16.msra.mxu0 0
    %169 = vmatprep.subr.bf16.mxu0 0
    %170 = vmatpush1.bf16.msra.mxu0 0
    %171 = vmatprep.subr.bf16.mxu0 0
    %172 = vmatpush1.bf16.msra.mxu0 0
    %173 = vmatprep.subr.bf16.mxu0 0
    %174 = vmatpush1.bf16.msra.mxu0 0
    %175 = vmatprep.subr.bf16.mxu0 0
    %176 = vmatpush1.bf16.msra.mxu0 0
    %177 = vmatprep.subr.bf16.mxu0 0
    %178 = vmatpush1.bf16.msra.mxu0 0
    %179 = vmatprep.subr.bf16.mxu0 0
    %180 = vmatpush1.bf16.msra.mxu0 0
    %181 = vmatprep.subr.bf16.mxu0 0
    %182 = vmatpush1.bf16.msra.mxu0 0
    %183 = vmatprep.mubr.bf16.mxu0 0
    %184 = vmatmul.mubr.bf16.gmra.mrb[0].mxu0 %v69
    %v185 = vpop.f32.mrb[0].mxu0
    %v186 = vadd.f32 0.0, %v185
    %v187 = vpop.f32.mrb[0].mxu0
    %v188 = vadd.f32 0.0, %v187
    %v189 = vpop.f32.mrb[0].mxu0
    %v190 = vadd.f32 0.0, %v189
    %v191 = vpop.f32.mrb[0].mxu0
    %v192 = vadd.f32 0.0, %v191
    %193 = vdwg.mxu0
    %v194 = vadd.f32 %v43, %v186
    %v195 = vadd.f32 %v44, %v188
    %v196 = vadd.f32 %v45, %v190
    %v197 = vadd.f32 %v46, %v192
    %198 = vst [vmem:[#allocation2] sm:$0xff] %v194
    %199 = vst [vmem:[#allocation2 + $0x8] sm:$0xff] %v195
    %200 = vst [vmem:[#allocation2 + $0x10] sm:$0xff] %v196
    %201 = vst [vmem:[#allocation2 + $0x18] sm:$0xff] %v197
    // Predicated region
    $region30: #{mlp_forward.3} parent=1 // pred_check
      %p202 = pneg %p35
    $region31: #{mlp_forward.3} parent=1 // pred_check_branch
      %204 = sbr.rel (%p202) target = $region33
    $region32: #{mlp_forward.3} parent=1 // pred_region
      %v205 = vld [vmem:[#allocation2] sm:$0xff]
      %v206 = vld [vmem:[#allocation2 + $0x8] sm:$0xff]
      %v207 = vld [vmem:[#allocation2 + $0x10] sm:$0xff]
      %v208 = vld [vmem:[#allocation2 + $0x18] sm:$0xff]
      %v209 = vld [vmem:[%s2] sm:$0x3]
      %v211 = vlaneseq
      %v212 = vshrl.u32 %v211, 7
      %v213 = vsub.s32 0, %v212
      %v214 = vrot.slane %v209, %v213
      %v215 = vlaneseq
      %v216 = vshrl.u32 %v215, 7
      %v217 = vsub.s32 1, %v216
      %v218 = vrot.slane %v209, %v217
      %v221 = vadd.f32 %v205, %v214
      %v222 = vadd.f32 %v206, %v218
      %v223 = vadd.f32 %v207, %v214
      %v224 = vadd.f32 %v208, %v218
      %v225 = vld [vmem:[%s3] sm:$0x3]
      %v226 = vld [vmem:[%s4] sm:$0x3]
      %v227 = vxor.u32 %v221, 2147483648
      %v228 = vxor.u32 %v222, 2147483648
      %v229 = vxor.u32 %v223, 2147483648
      %v230 = vxor.u32 %v224, 2147483648
      %v231 = vmul.f32 %v227, 1.442695
      %v232 = vpow.pop %v231
      %v233 = vmul.f32 %v228, 1.442695
      %v234 = vpow.pop %v233
      %v235 = vmul.f32 %v229, 1.442695
      %v236 = vpow.pop %v235
      %v237 = vmul.f32 %v230, 1.442695
      %v238 = vpow.pop %v237
      %v239 = vadd.f32 %v232, 1.0
      %v240 = vadd.f32 %v234, 1.0
      %v241 = vadd.f32 %v236, 1.0
      %v242 = vadd.f32 %v238, 1.0
      %v243 = vrcp.pop %v239
      %v244 = vmul.f32 1.0, %v243
      %v245 = vrcp.pop %v240
      %v246 = vmul.f32 1.0, %v245
      %v247 = vrcp.pop %v241
      %v248 = vmul.f32 1.0, %v247
      %v249 = vrcp.pop %v242
      %v250 = vmul.f32 1.0, %v249
      %v251 = vmul.f32 %v221, %v244
      %v252 = vmul.f32 %v222, %v246
      %v253 = vmul.f32 %v223, %v248
      %v254 = vmul.f32 %v224, %v250
      %v255 = vadd.f32 %v251, %v252
      %256 = vadd.xlane.f32.xlu0 %v255
      %v257 = vpop.xlane.xlu0 %256
      %v258 = vadd.f32 %v253, %v254
      %259 = vadd.xlane.f32.xlu0 %v258
      %v260 = vpop.xlane.xlu0 %259
      %v261 = vrcp.pop 256.0
      %v262 = vmul.f32 %v257, %v261
      %v263 = vmul.f32 %v260, %v261
      %v264 = vsub.f32 %v251, %v262
      %v265 = vsub.f32 %v252, %v262
      %v266 = vsub.f32 %v253, %v263
      %v267 = vsub.f32 %v254, %v263
      %v268 = vmul.f32 %v264, %v264
      %v269 = vmul.f32 %v265, %v265
      %v270 = vmul.f32 %v266, %v266
      %v271 = vmul.f32 %v267, %v267
      %v272 = vadd.f32 %v268, %v269
      %273 = vadd.xlane.f32.xlu0 %v272
      %v274 = vpop.xlane.xlu0 %273
      %v275 = vadd.f32 %v270, %v271
      %276 = vadd.xlane.f32.xlu0 %v275
      %v277 = vpop.xlane.xlu0 %276
      %v278 = vmul.f32 %v274, %v261
      %v279 = vmul.f32 %v277, %v261
      %v280 = vadd.f32 %v278, 1e-05
      %v281 = vadd.f32 %v279, 1e-05
      %v282 = vrsqrt.pop %v280
      %v283 = vrsqrt.pop %v281
      %v284 = vmul.f32 %v264, %v282
      %v285 = vmul.f32 %v265, %v282
      %v286 = vmul.f32 %v266, %v283
      %v287 = vmul.f32 %v267, %v283
      %v289 = vlaneseq
      %v290 = vshrl.u32 %v289, 7
      %v291 = vsub.s32 0, %v290
      %v292 = vrot.slane %v225, %v291
      %v293 = vlaneseq
      %v294 = vshrl.u32 %v293, 7
      %v295 = vsub.s32 1, %v294
      %v296 = vrot.slane %v225, %v295
      %v299 = vmul.f32 %v284, %v292
      %v300 = vmul.f32 %v285, %v296
      %v301 = vmul.f32 %v286, %v292
      %v302 = vmul.f32 %v287, %v296
      %v304 = vlaneseq
      %v305 = vshrl.u32 %v304, 7
      %v306 = vsub.s32 0, %v305
      %v307 = vrot.slane %v226, %v306
      %v308 = vlaneseq
      %v309 = vshrl.u32 %v308, 7
      %v310 = vsub.s32 1, %v309
      %v311 = vrot.slane %v226, %v310
      %v314 = vadd.f32 %v299, %v307
      %v315 = vadd.f32 %v300, %v311
      %v316 = vadd.f32 %v301, %v307
      %v317 = vadd.f32 %v302, %v311
      %v318 = vpack.c.bf16 %v316, %v314
      %v319 = vpack.c.bf16 %v317, %v315
      %v322 = vunpack.c.l.b16 %v318
      %v323 = vunpack.c.l.b16 %v319
      %v324 = vunpack.c.h.b16 %v318
      %v325 = vunpack.c.h.b16 %v319
      %v326 = vpack.c.b16 %v323, %v322
      %v327 = vpack.c.b16 %v325, %v324
      %330 = vst [vmem:[%s5] sm:$0xff] %v326
      %331 = vst [vmem:[%s5 + $0x8] sm:$0xff] %v327
    $region33: #{mlp_forward.3} parent=1 // pred_fallthru
      _
    // Predicated region
    $region34: #{mlp_forward.3} parent=1 // pred_check
      _
    $region35: #{mlp_forward.3} parent=1 // pred_check_branch
      %333 = sbr.rel (0) target = $region37
    $region36: #{mlp_forward.3} parent=1 // pred_region
      _
    $region37: #{mlp_forward.3} parent=1 // pred_fallthru
      _
    // Predicated region
    $region38: #{mlp_forward.3} parent=1 // pred_check
      _
    $region39: #{mlp_forward.3} parent=1 // pred_check_branch
      %335 = sbr.rel (0) target = $region41
    $region40: #{mlp_forward.3} parent=1 // pred_region
      _
    $region41: #{mlp_forward.3} parent=1 // pred_fallthru
      _
    %336 = vsyncpa [#allocation4], 1

// kernel: mlp_forward.5
$region0: #{mlp_forward.5}
  #allocation0 [shape = 'u32[]', space=smem, size = 0x4, offset = 0x4, fixed_abs, tag = 'smem constant byte address 0x4 - core index']
  #allocation1 [shape = 'u32[144,128]{1,0:T(1,128)}', space=vmem, size = 0x12000, scoped, tag = 'internal scratch']
  #allocation2 [shape = 'f32[16,128]{1,0:T(8,128)}', space=vmem, size = 0x2000, scoped, tag = 'scratch operand']
  %s0 = inlined_call_operand.vmem [shape: bf16[16,256], index: 0, kind: input, shape index: {}]
  %s1 = inlined_call_operand.vmem [shape: bf16[256,128], index: 1, kind: input, shape index: {}]
  %s2 = inlined_call_operand.vmem [shape: f32[1,128], index: 2, kind: input, shape index: {}]
  %s3 = inlined_call_operand.vmem [shape: f32[1,128], index: 3, kind: input, shape index: {}]
  %s4 = inlined_call_operand.vmem [shape: f32[1,128], index: 4, kind: input, shape index: {}]
  %s5 = inlined_call_operand.hbm [shape: f32[16,128], index: 5, kind: output, shape index: {}]
  %s6 = sld [smem:[#allocation0]]
  $region38: #{mlp_forward.5} parent=0
    _
  %s8 = ssub.s32 1, %s6
  %s9 = scalar_select 0, %s8, %s6
  $region1: #{mlp_forward.5} parent=0
    #allocation3 [shape = 'u8[8192]{0}', space=vmem, size = 0x2000, scoped, tag = 'output window, operand 0, single buffered']
    #allocation4 [shape = 's32[1]{0}', space=sflag, size = 0x4, scoped, tag = 'scoped memory for mlp_forward.5']
    %10 = vsyncpa [#allocation4], 0
    // Predicated region
    $region2: #{mlp_forward.5} parent=1 // pred_check
      _
    $region3: #{mlp_forward.5} parent=1 // pred_check_branch
      %12 = sbr.rel (0) target = $region5
    $region4: #{mlp_forward.5} parent=1 // pred_region
      _
    $region5: #{mlp_forward.5} parent=1 // pred_fallthru
      _
    // Predicated region
    $region6: #{mlp_forward.5} parent=1 // pred_check
      _
    $region7: #{mlp_forward.5} parent=1 // pred_check_branch
      %14 = sbr.rel (0) target = $region9
    $region8: #{mlp_forward.5} parent=1 // pred_region
      _
    $region9: #{mlp_forward.5} parent=1 // pred_fallthru
      _
    // Predicated region
    $region10: #{mlp_forward.5} parent=1 // pred_check
      _
    $region11: #{mlp_forward.5} parent=1 // pred_check_branch
      %16 = sbr.rel (0) target = $region13
    $region12: #{mlp_forward.5} parent=1 // pred_region
      _
    $region13: #{mlp_forward.5} parent=1 // pred_fallthru
      _
    // Predicated region
    $region14: #{mlp_forward.5} parent=1 // pred_check
      _
    $region15: #{mlp_forward.5} parent=1 // pred_check_branch
      %18 = sbr.rel (0) target = $region17
    $region16: #{mlp_forward.5} parent=1 // pred_region
      _
    $region17: #{mlp_forward.5} parent=1 // pred_fallthru
      _
    // Predicated region
    $region18: #{mlp_forward.5} parent=1 // pred_check
      _
    $region19: #{mlp_forward.5} parent=1 // pred_check_branch
      %20 = sbr.rel (0) target = $region21
    $region20: #{mlp_forward.5} parent=1 // pred_region
      _
    $region21: #{mlp_forward.5} parent=1 // pred_fallthru
      _
    %p22 = scmp.eq.s32.totalorder 0, 0
    // Predicated region
    $region22: #{mlp_forward.5} parent=1 // pred_check
      %p23 = pneg %p22
    $region23: #{mlp_forward.5} parent=1 // pred_check_branch
      %25 = sbr.rel (%p23) target = $region25
    $region24: #{mlp_forward.5} parent=1 // pred_region
      %26 = vst [vmem:[#allocation2] sm:$0xff] 0.0
      %27 = vst [vmem:[#allocation2 + $0x8] sm:$0xff] 0.0
    $region25: #{mlp_forward.5} parent=1 // pred_fallthru
      _
    %v28 = vld [vmem:[#allocation2] sm:$0xff]
    %v29 = vld [vmem:[#allocation2 + $0x8] sm:$0xff]
    %v30 = vld [vmem:[%s0] sm:$0xff]
    %v31 = vld [vmem:[%s0 + $0x8] sm:$0xff]
    %v32 = vld [vmem:[%s1] sm:$0xf]
    %v33 = vld [vmem:[%s1 + $0x4] sm:$0xf]
    %v34 = vld [vmem:[%s1 + $0x8] sm:$0xf]
    %v35 = vld [vmem:[%s1 + $0xc] sm:$0xf]
    %v36 = vld [vmem:[%s1 + $0x10] sm:$0xf]
    %v37 = vld [vmem:[%s1 + $0x14] sm:$0xf]
    %v38 = vld [vmem:[%s1 + $0x18] sm:$0xf]
    %v39 = vld [vmem:[%s1 + $0x1c] sm:$0xf]
    %v40 = vld [vmem:[%s1 + $0x20] sm:$0xf]
    %v41 = vld [vmem:[%s1 + $0x24] sm:$0xf]
    %v42 = vld [vmem:[%s1 + $0x28] sm:$0xf]
    %v43 = vld [vmem:[%s1 + $0x2c] sm:$0xf]
    %v44 = vld [vmem:[%s1 + $0x30] sm:$0xf]
    %v45 = vld [vmem:[%s1 + $0x34] sm:$0xf]
    %v46 = vld [vmem:[%s1 + $0x38] sm:$0xf]
    %v47 = vld [vmem:[%s1 + $0x3c] sm:$0xf]
    %v48 = vld [vmem:[%s1 + $0x40] sm:$0xf]
    %v49 = vld [vmem:[%s1 + $0x44] sm:$0xf]
    %v50 = vld [vmem:[%s1 + $0x48] sm:$0xf]
    %v51 = vld [vmem:[%s1 + $0x4c] sm:$0xf]
    %v52 = vld [vmem:[%s1 + $0x50] sm:$0xf]
    %v53 = vld [vmem:[%s1 + $0x54] sm:$0xf]
    %v54 = vld [vmem:[%s1 + $0x58] sm:$0xf]
    %v55 = vld [vmem:[%s1 + $0x5c] sm:$0xf]
    %v56 = vld [vmem:[%s1 + $0x60] sm:$0xf]
    %v57 = vld [vmem:[%s1 + $0x64] sm:$0xf]
    %v58 = vld [vmem:[%s1 + $0x68] sm:$0xf]
    %v59 = vld [vmem:[%s1 + $0x6c] sm:$0xf]
    %v60 = vld [vmem:[%s1 + $0x70] sm:$0xf]
    %v61 = vld [vmem:[%s1 + $0x74] sm:$0xf]
    %v62 = vld [vmem:[%s1 + $0x78] sm:$0xf]
    %v63 = vld [vmem:[%s1 + $0x7c] sm:$0xf]
    %v66 = vunpack.c.l.b16 %v30
    %v67 = vunpack.c.h.b16 %v30
    %v68 = vunpack.c.l.b16 %v31
    %v69 = vunpack.c.h.b16 %v31
    %v70 = vpack.c.b16 %v68, %v66
    %v71 = vpack.c.b16 %v69, %v67
    %v106 = vunpack.c.l.b16 %v32
    %v107 = vunpack.c.l.b16 %v33
    %v108 = vunpack.c.l.b16 %v34
    %v109 = vunpack.c.l.b16 %v35
    %v110 = vunpack.c.l.b16 %v36
    %v111 = vunpack.c.l.b16 %v37
    %v112 = vunpack.c.l.b16 %v38
    %v113 = vunpack.c.l.b16 %v39
    %v114 = vunpack.c.l.b16 %v40
    %v115 = vunpack.c.l.b16 %v41
    %v116 = vunpack.c.l.b16 %v42
    %v117 = vunpack.c.l.b16 %v43
    %v118 = vunpack.c.l.b16 %v44
    %v119 = vunpack.c.l.b16 %v45
    %v120 = vunpack.c.l.b16 %v46
    %v121 = vunpack.c.l.b16 %v47
    %v122 = vunpack.c.l.b16 %v48
    %v123 = vunpack.c.l.b16 %v49
    %v124 = vunpack.c.l.b16 %v50
    %v125 = vunpack.c.l.b16 %v51
    %v126 = vunpack.c.l.b16 %v52
    %v127 = vunpack.c.l.b16 %v53
    %v128 = vunpack.c.l.b16 %v54
    %v129 = vunpack.c.l.b16 %v55
    %v130 = vunpack.c.l.b16 %v56
    %v131 = vunpack.c.l.b16 %v57
    %v132 = vunpack.c.l.b16 %v58
    %v133 = vunpack.c.l.b16 %v59
    %v134 = vunpack.c.l.b16 %v60
    %v135 = vunpack.c.l.b16 %v61
    %v136 = vunpack.c.l.b16 %v62
    %v137 = vunpack.c.l.b16 %v63
    %v138 = vpack.c.b16 %v107, %v106
    %v139 = vpack.c.b16 %v109, %v108
    %v140 = vpack.c.b16 %v111, %v110
    %v141 = vpack.c.b16 %v113, %v112
    %v142 = vpack.c.b16 %v115, %v114
    %v143 = vpack.c.b16 %v117, %v116
    %v144 = vpack.c.b16 %v119, %v118
    %v145 = vpack.c.b16 %v121, %v120
    %v146 = vpack.c.b16 %v123, %v122
    %v147 = vpack.c.b16 %v125, %v124
    %v148 = vpack.c.b16 %v127, %v126
    %v149 = vpack.c.b16 %v129, %v128
    %v150 = vpack.c.b16 %v131, %v130
    %v151 = vpack.c.b16 %v133, %v132
    %v152 = vpack.c.b16 %v135, %v134
    %v153 = vpack.c.b16 %v137, %v136
    %170 = vmatprep.subr.bf16.mxu0 0
    %171 = vmatpush1.bf16.msra.mxu0 %v138
    %172 = vmatprep.subr.bf16.mxu0 0
    %173 = vmatpush1.bf16.msra.mxu0 %v139
    %174 = vmatprep.subr.bf16.mxu0 0
    %175 = vmatpush1.bf16.msra.mxu0 %v140
    %176 = vmatprep.subr.bf16.mxu0 0
    %177 = vmatpush1.bf16.msra.mxu0 %v141
    %178 = vmatprep.subr.bf16.mxu0 0
    %179 = vmatpush1.bf16.msra.mxu0 %v142
    %180 = vmatprep.subr.bf16.mxu0 0
    %181 = vmatpush1.bf16.msra.mxu0 %v143
    %182 = vmatprep.subr.bf16.mxu0 0
    %183 = vmatpush1.bf16.msra.mxu0 %v144
    %184 = vmatprep.subr.bf16.mxu0 0
    %185 = vmatpush1.bf16.msra.mxu0 %v145
    %186 = vmatprep.subr.bf16.mxu0 0
    %187 = vmatpush1.bf16.msra.mxu0 %v146
    %188 = vmatprep.subr.bf16.mxu0 0
    %189 = vmatpush1.bf16.msra.mxu0 %v147
    %190 = vmatprep.subr.bf16.mxu0 0
    %191 = vmatpush1.bf16.msra.mxu0 %v148
    %192 = vmatprep.subr.bf16.mxu0 0
    %193 = vmatpush1.bf16.msra.mxu0 %v149
    %194 = vmatprep.subr.bf16.mxu0 0
    %195 = vmatpush1.bf16.msra.mxu0 %v150
    %196 = vmatprep.subr.bf16.mxu0 0
    %197 = vmatpush1.bf16.msra.mxu0 %v151
    %198 = vmatprep.subr.bf16.mxu0 0
    %199 = vmatpush1.bf16.msra.mxu0 %v152
    %200 = vmatprep.subr.bf16.mxu0 0
    %201 = vmatpush1.bf16.msra.mxu0 %v153
    %202 = vmatprep.mubr.bf16.mxu0 %v71
    %203 = vmatmul.mubr.bf16.gmra.mrb[0].mxu0 %v70
    %v204 = vpop.f32.mrb[0].mxu0
    %v205 = vadd.f32 0.0, %v204
    %v206 = vpop.f32.mrb[0].mxu0
    %v207 = vpop.f32.mrb[0].mxu0
    %v208 = vadd.f32 0.0, %v207
    %v209 = vpop.f32.mrb[0].mxu0
    %210 = vdwg.mxu0
    %v211 = vadd.f32 %v28, %v205
    %v212 = vadd.f32 %v29, %v208
    %213 = vst [vmem:[#allocation2] sm:$0xff] %v211
    %214 = vst [vmem:[#allocation2 + $0x8] sm:$0xff] %v212
    // Predicated region
    $region26: #{mlp_forward.5} parent=1 // pred_check
      %p215 = pneg %p22
    $region27: #{mlp_forward.5} parent=1 // pred_check_branch
      %217 = sbr.rel (%p215) target = $region29
    $region28: #{mlp_forward.5} parent=1 // pred_region
      %v218 = vld [vmem:[#allocation2] sm:$0xff]
      %v219 = vld [vmem:[#allocation2 + $0x8] sm:$0xff]
      %v220 = vld [vmem:[%s2] sm:$0x1]
      %v222 = vlaneseq
      %v223 = vshrl.u32 %v222, 7
      %v224 = vsub.s32 0, %v223
      %v225 = vrot.slane %v220, %v224
      %v227 = vadd.f32 %v218, %v225
      %v228 = vadd.f32 %v219, %v225
      %v229 = vld [vmem:[%s3] sm:$0x1]
      %v230 = vld [vmem:[%s4] sm:$0x1]
      %231 = vadd.xlane.f32.xlu0 %v227
      %v232 = vpop.xlane.xlu0 %231
      %233 = vadd.xlane.f32.xlu0 %v228
      %v234 = vpop.xlane.xlu0 %233
      %v235 = vrcp.pop 128.0
      %v236 = vmul.f32 %v232, %v235
      %v237 = vmul.f32 %v234, %v235
      %v238 = vsub.f32 %v227, %v236
      %v239 = vsub.f32 %v228, %v237
      %v240 = vmul.f32 %v238, %v238
      %v241 = vmul.f32 %v239, %v239
      %242 = vadd.xlane.f32.xlu0 %v240
      %v243 = vpop.xlane.xlu0 %242
      %244 = vadd.xlane.f32.xlu0 %v241
      %v245 = vpop.xlane.xlu0 %244
      %v246 = vmul.f32 %v243, %v235
      %v247 = vmul.f32 %v245, %v235
      %v248 = vadd.f32 %v246, 1e-05
      %v249 = vadd.f32 %v247, 1e-05
      %v250 = vrsqrt.pop %v248
      %v251 = vrsqrt.pop %v249
      %v252 = vmul.f32 %v238, %v250
      %v253 = vmul.f32 %v239, %v251
      %v255 = vlaneseq
      %v256 = vshrl.u32 %v255, 7
      %v257 = vsub.s32 0, %v256
      %v258 = vrot.slane %v229, %v257
      %v260 = vmul.f32 %v252, %v258
      %v261 = vmul.f32 %v253, %v258
      %v263 = vlaneseq
      %v264 = vshrl.u32 %v263, 7
      %v265 = vsub.s32 0, %v264
      %v266 = vrot.slane %v230, %v265
      %v268 = vadd.f32 %v260, %v266
      %v269 = vadd.f32 %v261, %v266
      %v270 = vadd.f32 %v268, %v227
      %v271 = vadd.f32 %v269, %v228
      %272 = vst [vmem:[#allocation3] sm:$0xff] %v270
      %273 = vst [vmem:[#allocation3 + $0x8] sm:$0xff] %v271
    $region29: #{mlp_forward.5} parent=1 // pred_fallthru
      _
    // Predicated region
    $region30: #{mlp_forward.5} parent=1 // pred_check
      _
    $region31: #{mlp_forward.5} parent=1 // pred_check_branch
      %275 = sbr.rel (0) target = $region33
    $region32: #{mlp_forward.5} parent=1 // pred_region
      %s277 = ssub.s32 256, 256
      %278 = vsyncadd [#allocation4], %s277
      %s279 = sshll.u32 [#allocation3], 4
      %s280 = int_to_ptr.vmem [resolvable:$true] %s279
      %285 = dma.vmem_to_hbm [thread:$0]  %s280, 256, %s5, [#allocation4], 128, 128, 8
    $region33: #{mlp_forward.5} parent=1 // pred_fallthru
      _
    // Predicated region
    $region34: #{mlp_forward.5} parent=1 // pred_check
      _
    $region35: #{mlp_forward.5} parent=1 // pred_check_branch
      %287 = sbr.rel (0) target = $region37
    $region36: #{mlp_forward.5} parent=1 // pred_region
      %288 = dma.done [#allocation4], 256
    $region37: #{mlp_forward.5} parent=1 // pred_fallthru
      _
    %289 = vsyncpa [#allocation4], 1

</llo_original>
